<compile_context>
chip_gen: v6e
topology: v6e:2x2x1
jax: 0.10.0
libtpu: 0.0.40
codegen_flags: <defaults>
</compile_context>

<pallas_src>
import functools

import jax
import jax.numpy as jnp
from jax.experimental import pallas as pl
from jax.experimental.pallas import tpu as pltpu


def _round_up(n, m):
    return ((n + m - 1) // m) * m


def _pad_to(x, shape):
    pads = [(0, t - s) for s, t in zip(x.shape, shape)]
    return jnp.pad(x, pads)


# ---------------------------------------------------------------------------
# Fused NNCLR kernel (single invocation, whole problem resident in VMEM).
#   patches : (B*HW, CKp) bf16   wc : (CKp, Fp) bf16   bc          : (1, Fp) f32
#   w1      : (Fp, Fp)   bf16    b1 : (1, Fp)  f32
#   w2      : (Fp, Dp)   bf16    b2 : (1, Dp)  f32
#   w3      : (F,  Hd)   bf16    b3, gamma, beta : (1, Hd) f32     (F = 32, unpadded)
#   w4      : (Hd, Dp)   bf16    b4 : (1, Dp)  f32
# outputs:  z (B, Dp) f32,  h (B, Fp) f32,  p (B, Dp) f32   (padded; host slices back to D / F)
# ---------------------------------------------------------------------------
def _nnclr_fused_kernel(patches_ref, wc_ref, bc_ref,
                        w1_ref, b1_ref, w2_ref, b2_ref,
                        w3_ref, b3_ref, g_ref, bt_ref, w4_ref, b4_ref,
                        z_ref, h_ref, p_ref,
                        *, batch, hw, chunk, feat):
    fp = wc_ref.shape[1]
    n_chunks = hw // chunk
    inv_hw = jnp.float32(1.0 / hw)

    # ---- encoder: conv-as-matmul + bias + ReLU, global-avg-pool folded into the chunk loop ----
    def pooled_features(b):                      # b: static Python int (small B, unrolled)
        def body(c, acc):
            r0 = pl.multiple_of(b * hw + c * chunk, chunk)
            xs = patches_ref[pl.ds(r0, chunk), :]                            # (chunk, CKp) bf16
            y = jnp.dot(xs, wc_ref[...], preferred_element_type=jnp.float32)
            y = jnp.maximum(y + bc_ref[...], 0.0)                            # ReLU, f32
            return acc + jnp.sum(y, axis=0, keepdims=True)                   # pooled partial sum
        return jax.lax.fori_loop(0, n_chunks, body,
                                 jnp.zeros((1, fp), jnp.float32))

    h = jnp.concatenate([pooled_features(b) for b in range(batch)], axis=0) * inv_hw
    h_ref[...] = h                                                           # (B, Fp) f32

    # ---- projection MLP (bn=False): Linear -> ReLU -> Linear ----
    a1 = jnp.dot(h.astype(jnp.bfloat16), w1_ref[...],
                 preferred_element_type=jnp.float32) + b1_ref[...]
    a1 = jnp.maximum(a1, 0.0)
    z = jnp.dot(a1.astype(jnp.bfloat16), w2_ref[...],
                preferred_element_type=jnp.float32) + b2_ref[...]            # (B, Dp) f32
    z_ref[...] = z

    # ---- prediction head: Linear -> BatchNorm1d (batch stats) -> ReLU -> Linear ----
    # w3 is unpadded (feat, Hd); feed it the real (first `feat`) columns of z.
    a3 = jnp.dot(z[:, :feat].astype(jnp.bfloat16), w3_ref[...],
                 preferred_element_type=jnp.float32) + b3_ref[...]           # (B, Hd) f32
    mu = jnp.mean(a3, axis=0, keepdims=True)
    var = jnp.mean((a3 - mu) ** 2, axis=0, keepdims=True)                    # biased var, eps=1e-5
    a3 = (a3 - mu) * jax.lax.rsqrt(var + 1e-5)
    a3 = jnp.maximum(a3 * g_ref[...] + bt_ref[...], 0.0)                     # scale/shift + ReLU (f32)
    p_ref[...] = jnp.dot(a3.astype(jnp.bfloat16), w4_ref[...],
                         preferred_element_type=jnp.float32) + b4_ref[...]
    # TODO(synk): BatchNorm1d running_mean/running_var momentum updates are stateful and not modeled.


# ---------------------------------------------------------------------------
# NNCLR forward (host glue: slim im2col, zero-padding to lane-dense tiles, bf16 casts)
# ---------------------------------------------------------------------------
def nnclr_forward(x, params):
    B, C, H, W = x.shape
    F = params["w_conv"].shape[0]      # num_ft
    D = params["w2"].shape[1]          # dim_out
    Hd = params["w3"].shape[1]         # prediction hidden (2048)
    assert F == D, "NNCLR prediction-head wiring requires dim_out == num_ft"

    HW = H * W
    CK = C * 9
    CKp = _round_up(max(CK, 128), 128)   # im2col contraction dim -> clean lane tile
    Fp = _round_up(max(F, 128), 128)     # lane-dense feature dims for h/z/p stores
    Dp = _round_up(max(D, 128), 128)
    chunk = 64 if HW % 64 == 0 else HW   # conv row-chunk (keeps live tile ~16 vregs)

    # --- slim im2col: one tiny NHWC transpose + 9 shifted views (no 5-D transpose) ---
    # TODO(synk): fold the im2col into the kernel itself (9 static slices of padded x in VMEM)
    # to take the last host-side XLA fusion off the critical path.
    xp = jnp.pad(x, ((0, 0), (0, 0), (1, 1), (1, 1))).transpose(0, 2, 3, 1)   # (B, H+2, W+2, C)
    cols = [xp[:, di:di + H, dj:dj + W, :] for di in range(3) for dj in range(3)]
    patches = jnp.stack(cols, axis=-1).reshape(B * HW, CK)     # (B*HW, C*9), (c, kh, kw) order
    patches = _pad_to(patches, (B * HW, CKp)).astype(jnp.bfloat16)

    # --- weights, tile-aligned where it is free, bf16 matmul operands ---
    wc = _pad_to(params["w_conv"].reshape(F, CK).T, (CKp, Fp)).astype(jnp.bfloat16)
    bc = _pad_to(params["b_conv"].reshape(1, F), (1, Fp)).astype(jnp.float32)
    w1 = _pad_to(params["w1"], (Fp, Fp)).astype(jnp.bfloat16)
    b1 = _pad_to(params["b1"].reshape(1, F), (1, Fp)).astype(jnp.float32)
    w2 = _pad_to(params["w2"], (Fp, Dp)).astype(jnp.bfloat16)
    b2 = _pad_to(params["b2"].reshape(1, D), (1, Dp)).astype(jnp.float32)
    w3 = params["w3"].astype(jnp.bfloat16)                     # (F, Hd): no first-dim pad -> 4x less DMA
    b3 = params["b3"].reshape(1, Hd).astype(jnp.float32)
    gamma = params["gamma"].reshape(1, Hd).astype(jnp.float32)
    beta = params["beta"].reshape(1, Hd).astype(jnp.float32)
    w4 = _pad_to(params["w4"], (Hd, Dp)).astype(jnp.bfloat16)  # padded so the p store is lane-dense
    b4 = _pad_to(params["b4"].reshape(1, D), (1, Dp)).astype(jnp.float32)

    # Whole problem (<1.5 MiB) stays resident in VMEM: single call, no grid, no index maps.
    # TODO(synk): batch both NNCLR views (x0, x1) into one call to amortize the w3/w4 DMA.
    # TODO(synk): if pred_hidden or B*HW grow (v7x: 64 MiB VMEM), add a grid over the hidden dim
    # and a ("parallel",) batch axis for the second TensorCore.
    vmem = pl.BlockSpec(memory_space=pltpu.MemorySpace.VMEM)
    kernel = functools.partial(_nnclr_fused_kernel, batch=B, hw=HW, chunk=chunk, feat=F)
    z_pad, h_pad, p_pad = pl.pallas_call(
        kernel,
        out_shape=(jax.ShapeDtypeStruct((B, Dp), jnp.float32),   # z
                   jax.ShapeDtypeStruct((B, Fp), jnp.float32),   # h
                   jax.ShapeDtypeStruct((B, Dp), jnp.float32)),  # p
        in_specs=[vmem] * 13,
        out_specs=(vmem, vmem, vmem),
    )(patches, wc, bc, w1, b1, w2, b2, w3, b3, gamma, beta, w4, b4)

    # Slice the real (unpadded) feature widths back out; torch.flatten(h, 1) is a no-op here.
    return z_pad[:, :D], h_pad[:, :F], p_pad[:, :D]


def init_params(key, c_in, num_ft, dim_out, pred_hidden):
    ks = jax.random.split(key, 8)
    scale = 0.05
    return {
        "w_conv": jax.random.normal(ks[0], (num_ft, c_in, 3, 3), jnp.float32) * scale,
        "b_conv": jax.random.normal(ks[1], (num_ft,), jnp.float32) * scale,
        "w1": jax.random.normal(ks[2], (num_ft, num_ft), jnp.float32) * scale,
        "b1": jax.random.normal(ks[3], (num_ft,), jnp.float32) * scale,
        "w2": jax.random.normal(ks[4], (num_ft, dim_out), jnp.float32) * scale,
        "b2": jax.random.normal(ks[5], (dim_out,), jnp.float32) * scale,
        "w3": jax.random.normal(ks[6], (num_ft, pred_hidden), jnp.float32) * scale,
        "b3": jnp.zeros((pred_hidden,), jnp.float32),
        "gamma": jnp.ones((pred_hidden,), jnp.float32),    # BatchNorm1d init
        "beta": jnp.zeros((pred_hidden,), jnp.float32),
        "w4": jax.random.normal(ks[7], (pred_hidden, dim_out), jnp.float32) * scale,
        "b4": jnp.zeros((dim_out,), jnp.float32),
    }


if __name__ == "__main__":
    B, C, H, W = 2, 4, 16, 16
    num_ft = 32
    dim_out = 32          # must equal num_ft per the module's prediction-head wiring
    pred_hidden = 2048    # hard-coded h_dims in _prediction_mlp

    key = jax.random.PRNGKey(0)
    k_x, k_p = jax.random.split(key)
    x = jax.random.normal(k_x, (B, C, H, W), jnp.float32)
    params = init_params(k_p, C, num_ft, dim_out, pred_hidden)

    z, h, p = jax.jit(nnclr_forward)(x, params)
    jax.block_until_ready((z, h, p))

    assert h.shape == (B, num_ft)
    assert z.shape == (B, dim_out)
    assert p.shape == (B, dim_out)
    assert bool(jnp.isfinite(z).all() & jnp.isfinite(h).all() & jnp.isfinite(p).all())
    print("KERNEL_OK")
</pallas_src>

<mosaic_0001>
module attributes {stable_mosaic.version = 11 : i64} {
  func.func @_nnclr_fused_kernel(%arg0: memref<512x128xbf16, #tpu.memory_space<vmem>>, %arg1: memref<128x128xbf16, #tpu.memory_space<vmem>>, %arg2: memref<1x128xf32, #tpu.memory_space<vmem>>, %arg3: memref<128x128xbf16, #tpu.memory_space<vmem>>, %arg4: memref<1x128xf32, #tpu.memory_space<vmem>>, %arg5: memref<128x128xbf16, #tpu.memory_space<vmem>>, %arg6: memref<1x128xf32, #tpu.memory_space<vmem>>, %arg7: memref<32x2048xbf16, #tpu.memory_space<vmem>>, %arg8: memref<1x2048xf32, #tpu.memory_space<vmem>>, %arg9: memref<1x2048xf32, #tpu.memory_space<vmem>>, %arg10: memref<1x2048xf32, #tpu.memory_space<vmem>>, %arg11: memref<2048x128xbf16, #tpu.memory_space<vmem>>, %arg12: memref<1x128xf32, #tpu.memory_space<vmem>>, %arg13: memref<2x128xf32, #tpu.memory_space<vmem>>, %arg14: memref<2x128xf32, #tpu.memory_space<vmem>>, %arg15: memref<2x128xf32, #tpu.memory_space<vmem>>) attributes {dimension_semantics = [], scalar_prefetch = 0 : i64, scratch_operands = 0 : i64, tpu.core_type = #tpu.core_type<tc>} {
    %cst = arith.constant 0.000000e+00 : f32
    %0 = vector.broadcast %cst : f32 to vector<1x128xf32>
    %c0_i32 = arith.constant 0 : i32
    %c4_i32 = arith.constant 4 : i32
    %1 = arith.addi %c0_i32, %c4_i32 : i32
    %c1_i32 = arith.constant 1 : i32
    %2 = scf.for %arg16 = %c0_i32 to %1 step %c1_i32 iter_args(%arg17 = %0) -> (vector<1x128xf32>)  : i32 {
      %c64_i32 = arith.constant 64 : i32
      %65 = arith.muli %arg16, %c64_i32 : i32
      %c0_i32_43 = arith.constant 0 : i32
      %66 = arith.addi %c0_i32_43, %65 : i32
      %67 = tpu.assume_multiple %66, 64 : i32
      %68 = arith.index_cast %67 : i32 to index
      %c0_44 = arith.constant 0 : index
      %69 = vector.load %arg0[%68, %c0_44] : memref<512x128xbf16, #tpu.memory_space<vmem>>, vector<64x128xbf16>
      %c0_45 = arith.constant 0 : index
      %c0_46 = arith.constant 0 : index
      %70 = vector.load %arg1[%c0_45, %c0_46] : memref<128x128xbf16, #tpu.memory_space<vmem>>, vector<128x128xbf16>
      %cst_47 = arith.constant dense<0.000000e+00> : vector<64x128xf32>
      %71 = tpu.matmul %69, %70, %cst_47 {dimension_numbers = #tpu.dot_dimension_numbers<[1], [0], [0], [1], [0, 0, 1, 1], [], []>} : vector<64x128xbf16>, vector<128x128xbf16>, vector<64x128xf32> -> vector<64x128xf32>
      %c0_48 = arith.constant 0 : index
      %c0_49 = arith.constant 0 : index
      %72 = vector.load %arg2[%c0_48, %c0_49] : memref<1x128xf32, #tpu.memory_space<vmem>>, vector<1x128xf32>
      %73 = vector.broadcast %72 : vector<1x128xf32> to vector<64x128xf32>
      %74 = arith.addf %71, %73 : vector<64x128xf32>
      %cst_50 = arith.constant 0.000000e+00 : f32
      %75 = vector.broadcast %cst_50 : f32 to vector<64x128xf32>
      %76 = arith.maximumf %74, %75 : vector<64x128xf32>
      %cst_51 = arith.constant dense<0.000000e+00> : vector<128xf32>
      %77 = vector.multi_reduction <add>, %76, %cst_51 [0] : vector<64x128xf32> to vector<128xf32>
      %78 = vector.shape_cast %77 : vector<128xf32> to vector<1x128xf32>
      %79 = arith.addf %arg17, %78 : vector<1x128xf32>
      scf.yield %79 : vector<1x128xf32>
    }
    %c4_i32_0 = arith.constant 4 : i32
    %cst_1 = arith.constant 0.000000e+00 : f32
    %3 = vector.broadcast %cst_1 : f32 to vector<1x128xf32>
    %c0_i32_2 = arith.constant 0 : i32
    %c4_i32_3 = arith.constant 4 : i32
    %4 = arith.addi %c0_i32_2, %c4_i32_3 : i32
    %c1_i32_4 = arith.constant 1 : i32
    %5 = scf.for %arg16 = %c0_i32_2 to %4 step %c1_i32_4 iter_args(%arg17 = %3) -> (vector<1x128xf32>)  : i32 {
      %c64_i32 = arith.constant 64 : i32
      %65 = arith.muli %arg16, %c64_i32 : i32
      %c256_i32 = arith.constant 256 : i32
      %66 = arith.addi %c256_i32, %65 : i32
      %67 = tpu.assume_multiple %66, 64 : i32
      %68 = arith.index_cast %67 : i32 to index
      %c0_43 = arith.constant 0 : index
      %69 = vector.load %arg0[%68, %c0_43] : memref<512x128xbf16, #tpu.memory_space<vmem>>, vector<64x128xbf16>
      %c0_44 = arith.constant 0 : index
      %c0_45 = arith.constant 0 : index
      %70 = vector.load %arg1[%c0_44, %c0_45] : memref<128x128xbf16, #tpu.memory_space<vmem>>, vector<128x128xbf16>
      %cst_46 = arith.constant dense<0.000000e+00> : vector<64x128xf32>
      %71 = tpu.matmul %69, %70, %cst_46 {dimension_numbers = #tpu.dot_dimension_numbers<[1], [0], [0], [1], [0, 0, 1, 1], [], []>} : vector<64x128xbf16>, vector<128x128xbf16>, vector<64x128xf32> -> vector<64x128xf32>
      %c0_47 = arith.constant 0 : index
      %c0_48 = arith.constant 0 : index
      %72 = vector.load %arg2[%c0_47, %c0_48] : memref<1x128xf32, #tpu.memory_space<vmem>>, vector<1x128xf32>
      %73 = vector.broadcast %72 : vector<1x128xf32> to vector<64x128xf32>
      %74 = arith.addf %71, %73 : vector<64x128xf32>
      %cst_49 = arith.constant 0.000000e+00 : f32
      %75 = vector.broadcast %cst_49 : f32 to vector<64x128xf32>
      %76 = arith.maximumf %74, %75 : vector<64x128xf32>
      %cst_50 = arith.constant dense<0.000000e+00> : vector<128xf32>
      %77 = vector.multi_reduction <add>, %76, %cst_50 [0] : vector<64x128xf32> to vector<128xf32>
      %78 = vector.shape_cast %77 : vector<128xf32> to vector<1x128xf32>
      %79 = arith.addf %arg17, %78 : vector<1x128xf32>
      scf.yield %79 : vector<1x128xf32>
    }
    %c4_i32_5 = arith.constant 4 : i32
    %6 = tpu.concatenate %2, %5 in 0 : vector<1x128xf32>, vector<1x128xf32> -> vector<2x128xf32>
    %cst_6 = arith.constant 3.906250e-03 : f32
    %7 = vector.broadcast %cst_6 : f32 to vector<2x128xf32>
    %8 = arith.mulf %6, %7 : vector<2x128xf32>
    %c0 = arith.constant 0 : index
    %c0_7 = arith.constant 0 : index
    %9 = vector.load %arg14[%c0, %c0_7] : memref<2x128xf32, #tpu.memory_space<vmem>>, vector<2x128xf32>
    tpu.vector_store %arg14[%c0, %c0_7], %8 {strides = array<i32>} : memref<2x128xf32, #tpu.memory_space<vmem>>, vector<2x128xf32>,
    %10 = arith.truncf %8 : vector<2x128xf32> to vector<2x128xbf16>
    %c0_8 = arith.constant 0 : index
    %c0_9 = arith.constant 0 : index
    %11 = vector.load %arg3[%c0_8, %c0_9] : memref<128x128xbf16, #tpu.memory_space<vmem>>, vector<128x128xbf16>
    %cst_10 = arith.constant dense<0.000000e+00> : vector<2x128xf32>
    %12 = tpu.matmul %10, %11, %cst_10 {dimension_numbers = #tpu.dot_dimension_numbers<[1], [0], [0], [1], [0, 0, 1, 1], [], []>} : vector<2x128xbf16>, vector<128x128xbf16>, vector<2x128xf32> -> vector<2x128xf32>
    %c0_11 = arith.constant 0 : index
    %c0_12 = arith.constant 0 : index
    %13 = vector.load %arg4[%c0_11, %c0_12] : memref<1x128xf32, #tpu.memory_space<vmem>>, vector<1x128xf32>
    %14 = vector.broadcast %13 : vector<1x128xf32> to vector<2x128xf32>
    %15 = arith.addf %12, %14 : vector<2x128xf32>
    %cst_13 = arith.constant 0.000000e+00 : f32
    %16 = vector.broadcast %cst_13 : f32 to vector<2x128xf32>
    %17 = arith.maximumf %15, %16 : vector<2x128xf32>
    %18 = arith.truncf %17 : vector<2x128xf32> to vector<2x128xbf16>
    %c0_14 = arith.constant 0 : index
    %c0_15 = arith.constant 0 : index
    %19 = vector.load %arg5[%c0_14, %c0_15] : memref<128x128xbf16, #tpu.memory_space<vmem>>, vector<128x128xbf16>
    %cst_16 = arith.constant dense<0.000000e+00> : vector<2x128xf32>
    %20 = tpu.matmul %18, %19, %cst_16 {dimension_numbers = #tpu.dot_dimension_numbers<[1], [0], [0], [1], [0, 0, 1, 1], [], []>} : vector<2x128xbf16>, vector<128x128xbf16>, vector<2x128xf32> -> vector<2x128xf32>
    %c0_17 = arith.constant 0 : index
    %c0_18 = arith.constant 0 : index
    %21 = vector.load %arg6[%c0_17, %c0_18] : memref<1x128xf32, #tpu.memory_space<vmem>>, vector<1x128xf32>
    %22 = vector.broadcast %21 : vector<1x128xf32> to vector<2x128xf32>
    %23 = arith.addf %20, %22 : vector<2x128xf32>
    %c0_19 = arith.constant 0 : index
    %c0_20 = arith.constant 0 : index
    %24 = vector.load %arg13[%c0_19, %c0_20] : memref<2x128xf32, #tpu.memory_space<vmem>>, vector<2x128xf32>
    tpu.vector_store %arg13[%c0_19, %c0_20], %23 {strides = array<i32>} : memref<2x128xf32, #tpu.memory_space<vmem>>, vector<2x128xf32>,
    %25 = vector.extract_strided_slice %23 {offsets = [0, 0], sizes = [2, 32], strides = [1, 1]} : vector<2x128xf32> to vector<2x32xf32>
    %26 = arith.truncf %25 : vector<2x32xf32> to vector<2x32xbf16>
    %c0_21 = arith.constant 0 : index
    %c0_22 = arith.constant 0 : index
    %27 = vector.load %arg7[%c0_21, %c0_22] : memref<32x2048xbf16, #tpu.memory_space<vmem>>, vector<32x2048xbf16>
    %cst_23 = arith.constant dense<0.000000e+00> : vector<2x2048xf32>
    %28 = tpu.matmul %26, %27, %cst_23 {dimension_numbers = #tpu.dot_dimension_numbers<[1], [0], [0], [1], [0, 0, 1, 1], [], []>} : vector<2x32xbf16>, vector<32x2048xbf16>, vector<2x2048xf32> -> vector<2x2048xf32>
    %c0_24 = arith.constant 0 : index
    %c0_25 = arith.constant 0 : index
    %29 = vector.load %arg8[%c0_24, %c0_25] : memref<1x2048xf32, #tpu.memory_space<vmem>>, vector<1x2048xf32>
    %30 = vector.broadcast %29 : vector<1x2048xf32> to vector<2x2048xf32>
    %31 = arith.addf %28, %30 : vector<2x2048xf32>
    %cst_26 = arith.constant dense<0.000000e+00> : vector<2048xf32>
    %32 = vector.multi_reduction <add>, %31, %cst_26 [0] : vector<2x2048xf32> to vector<2048xf32>
    %33 = vector.shape_cast %32 : vector<2048xf32> to vector<1x2048xf32>
    %cst_27 = arith.constant 2.000000e+00 : f32
    %34 = vector.broadcast %cst_27 : f32 to vector<1x2048xf32>
    %35 = arith.divf %33, %34 : vector<1x2048xf32>
    %36 = vector.broadcast %35 : vector<1x2048xf32> to vector<2x2048xf32>
    %37 = arith.subf %31, %36 : vector<2x2048xf32>
    %38 = arith.mulf %37, %37 : vector<2x2048xf32>
    %cst_28 = arith.constant dense<0.000000e+00> : vector<2048xf32>
    %39 = vector.multi_reduction <add>, %38, %cst_28 [0] : vector<2x2048xf32> to vector<2048xf32>
    %40 = vector.shape_cast %39 : vector<2048xf32> to vector<1x2048xf32>
    %cst_29 = arith.constant 2.000000e+00 : f32
    %41 = vector.broadcast %cst_29 : f32 to vector<1x2048xf32>
    %42 = arith.divf %40, %41 : vector<1x2048xf32>
    %43 = vector.broadcast %35 : vector<1x2048xf32> to vector<2x2048xf32>
    %44 = arith.subf %31, %43 : vector<2x2048xf32>
    %cst_30 = arith.constant 9.99999974E-6 : f32
    %45 = vector.broadcast %cst_30 : f32 to vector<1x2048xf32>
    %46 = arith.addf %42, %45 : vector<1x2048xf32>
    %47 = math.rsqrt %46 : vector<1x2048xf32>
    %48 = vector.broadcast %47 : vector<1x2048xf32> to vector<2x2048xf32>
    %49 = arith.mulf %44, %48 : vector<2x2048xf32>
    %c0_31 = arith.constant 0 : index
    %c0_32 = arith.constant 0 : index
    %50 = vector.load %arg9[%c0_31, %c0_32] : memref<1x2048xf32, #tpu.memory_space<vmem>>, vector<1x2048xf32>
    %51 = vector.broadcast %50 : vector<1x2048xf32> to vector<2x2048xf32>
    %52 = arith.mulf %49, %51 : vector<2x2048xf32>
    %c0_33 = arith.constant 0 : index
    %c0_34 = arith.constant 0 : index
    %53 = vector.load %arg10[%c0_33, %c0_34] : memref<1x2048xf32, #tpu.memory_space<vmem>>, vector<1x2048xf32>
    %54 = vector.broadcast %53 : vector<1x2048xf32> to vector<2x2048xf32>
    %55 = arith.addf %52, %54 : vector<2x2048xf32>
    %cst_35 = arith.constant 0.000000e+00 : f32
    %56 = vector.broadcast %cst_35 : f32 to vector<2x2048xf32>
    %57 = arith.maximumf %55, %56 : vector<2x2048xf32>
    %58 = arith.truncf %57 : vector<2x2048xf32> to vector<2x2048xbf16>
    %c0_36 = arith.constant 0 : index
    %c0_37 = arith.constant 0 : index
    %59 = vector.load %arg11[%c0_36, %c0_37] : memref<2048x128xbf16, #tpu.memory_space<vmem>>, vector<2048x128xbf16>
    %cst_38 = arith.constant dense<0.000000e+00> : vector<2x128xf32>
    %60 = tpu.matmul %58, %59, %cst_38 {dimension_numbers = #tpu.dot_dimension_numbers<[1], [0], [0], [1], [0, 0, 1, 1], [], []>} : vector<2x2048xbf16>, vector<2048x128xbf16>, vector<2x128xf32> -> vector<2x128xf32>
    %c0_39 = arith.constant 0 : index
    %c0_40 = arith.constant 0 : index
    %61 = vector.load %arg12[%c0_39, %c0_40] : memref<1x128xf32, #tpu.memory_space<vmem>>, vector<1x128xf32>
    %62 = vector.broadcast %61 : vector<1x128xf32> to vector<2x128xf32>
    %63 = arith.addf %60, %62 : vector<2x128xf32>
    %c0_41 = arith.constant 0 : index
    %c0_42 = arith.constant 0 : index
    %64 = vector.load %arg15[%c0_41, %c0_42] : memref<2x128xf32, #tpu.memory_space<vmem>>, vector<2x128xf32>
    tpu.vector_store %arg15[%c0_41, %c0_42], %63 {strides = array<i32>} : memref<2x128xf32, #tpu.memory_space<vmem>>, vector<2x128xf32>,
    return
  }
}

</mosaic_0001>

<llo_original>
// kernel: nnclr_forward.1
$region0: #{nnclr_forward.1}
  #allocation0 [shape = 'u32[]', space=smem, size = 0x4, offset = 0x4, fixed_abs, tag = 'smem constant byte address 0x4 - core index']
  #allocation1 [shape = 'u32[144,128]{1,0:T(1,128)}', space=vmem, size = 0x12000, scoped, tag = 'internal scratch']
  %s0 = inlined_call_operand.vmem [shape: bf16[512,128], index: 0, kind: input, shape index: {}]
  %s1 = inlined_call_operand.vmem [shape: bf16[128,128], index: 1, kind: input, shape index: {}]
  %s2 = inlined_call_operand.vmem [shape: f32[1,128], index: 2, kind: input, shape index: {}]
  %s3 = inlined_call_operand.vmem [shape: bf16[128,128], index: 3, kind: input, shape index: {}]
  %s4 = inlined_call_operand.vmem [shape: f32[1,128], index: 4, kind: input, shape index: {}]
  %s5 = inlined_call_operand.vmem [shape: bf16[128,128], index: 5, kind: input, shape index: {}]
  %s6 = inlined_call_operand.vmem [shape: f32[1,128], index: 6, kind: input, shape index: {}]
  %s7 = inlined_call_operand.vmem [shape: bf16[32,2048], index: 7, kind: input, shape index: {}]
  %s8 = inlined_call_operand.vmem [shape: f32[1,2048], index: 8, kind: input, shape index: {}]
  %s9 = inlined_call_operand.vmem [shape: f32[1,2048], index: 9, kind: input, shape index: {}]
  %s10 = inlined_call_operand.vmem [shape: f32[1,2048], index: 10, kind: input, shape index: {}]
  %s11 = inlined_call_operand.vmem [shape: bf16[2048,128], index: 11, kind: input, shape index: {}]
  %s12 = inlined_call_operand.vmem [shape: f32[1,128], index: 12, kind: input, shape index: {}]
  %s13 = inlined_call_operand.hbm [shape: f32[2,128], index: 13, kind: output, shape index: {0}]
  %s14 = inlined_call_operand.hbm [shape: f32[2,128], index: 14, kind: output, shape index: {1}]
  %s15 = inlined_call_operand.hbm [shape: f32[2,128], index: 15, kind: output, shape index: {2}]
  %16 = xla_tuple %s13, %s14, %s15
  %s17 = sld [smem:[#allocation0]]
  $region92: #{nnclr_forward.1} parent=0
    _
  %s19 = ssub.s32 1, %s17
  %s20 = scalar_select 0, %s19, %s17
  $region1: #{nnclr_forward.1} parent=0
    #allocation2 [shape = 'u8[1024]{0}', space=vmem, size = 0x400, scoped, tag = 'output window, operand 0, single buffered']
    #allocation3 [shape = 's32[1]{0}', space=sflag, size = 0x4, scoped, tag = 'scoped memory for nnclr_forward.1']
    #allocation4 [shape = 'u8[1024]{0}', space=vmem, size = 0x400, scoped, tag = 'output window, operand 1, single buffered']
    #allocation5 [shape = 's32[1]{0}', space=sflag, size = 0x4, scoped, tag = 'scoped memory for nnclr_forward.1']
    #allocation6 [shape = 'u8[1024]{0}', space=vmem, size = 0x400, scoped, tag = 'output window, operand 2, single buffered']
    %21 = vsyncpa [#allocation3], 0
    %22 = vsyncpa [#allocation5], 0
    // Predicated region
    $region2: #{nnclr_forward.1} parent=1 // pred_check
      _
    $region3: #{nnclr_forward.1} parent=1 // pred_check_branch
      %24 = sbr.rel (0) target = $region5
    $region4: #{nnclr_forward.1} parent=1 // pred_region
      _
    $region5: #{nnclr_forward.1} parent=1 // pred_fallthru
      _
    // Predicated region
    $region6: #{nnclr_forward.1} parent=1 // pred_check
      _
    $region7: #{nnclr_forward.1} parent=1 // pred_check_branch
      %26 = sbr.rel (0) target = $region9
    $region8: #{nnclr_forward.1} parent=1 // pred_region
      _
    $region9: #{nnclr_forward.1} parent=1 // pred_fallthru
      _
    // Predicated region
    $region10: #{nnclr_forward.1} parent=1 // pred_check
      _
    $region11: #{nnclr_forward.1} parent=1 // pred_check_branch
      %28 = sbr.rel (0) target = $region13
    $region12: #{nnclr_forward.1} parent=1 // pred_region
      _
    $region13: #{nnclr_forward.1} parent=1 // pred_fallthru
      _
    // Predicated region
    $region14: #{nnclr_forward.1} parent=1 // pred_check
      _
    $region15: #{nnclr_forward.1} parent=1 // pred_check_branch
      %30 = sbr.rel (0) target = $region17
    $region16: #{nnclr_forward.1} parent=1 // pred_region
      _
    $region17: #{nnclr_forward.1} parent=1 // pred_fallthru
      _
    // Predicated region
    $region18: #{nnclr_forward.1} parent=1 // pred_check
      _
    $region19: #{nnclr_forward.1} parent=1 // pred_check_branch
      %32 = sbr.rel (0) target = $region21
    $region20: #{nnclr_forward.1} parent=1 // pred_region
      _
    $region21: #{nnclr_forward.1} parent=1 // pred_fallthru
      _
    // Predicated region
    $region22: #{nnclr_forward.1} parent=1 // pred_check
      _
    $region23: #{nnclr_forward.1} parent=1 // pred_check_branch
      %34 = sbr.rel (0) target = $region25
    $region24: #{nnclr_forward.1} parent=1 // pred_region
      _
    $region25: #{nnclr_forward.1} parent=1 // pred_fallthru
      _
    // Predicated region
    $region26: #{nnclr_forward.1} parent=1 // pred_check
      _
    $region27: #{nnclr_forward.1} parent=1 // pred_check_branch
      %36 = sbr.rel (0) target = $region29
    $region28: #{nnclr_forward.1} parent=1 // pred_region
      _
    $region29: #{nnclr_forward.1} parent=1 // pred_fallthru
      _
    // Predicated region
    $region30: #{nnclr_forward.1} parent=1 // pred_check
      _
    $region31: #{nnclr_forward.1} parent=1 // pred_check_branch
      %38 = sbr.rel (0) target = $region33
    $region32: #{nnclr_forward.1} parent=1 // pred_region
      _
    $region33: #{nnclr_forward.1} parent=1 // pred_fallthru
      _
    // Predicated region
    $region34: #{nnclr_forward.1} parent=1 // pred_check
      _
    $region35: #{nnclr_forward.1} parent=1 // pred_check_branch
      %40 = sbr.rel (0) target = $region37
    $region36: #{nnclr_forward.1} parent=1 // pred_region
      _
    $region37: #{nnclr_forward.1} parent=1 // pred_fallthru
      _
    // Predicated region
    $region38: #{nnclr_forward.1} parent=1 // pred_check
      _
    $region39: #{nnclr_forward.1} parent=1 // pred_check_branch
      %42 = sbr.rel (0) target = $region41
    $region40: #{nnclr_forward.1} parent=1 // pred_region
      _
    $region41: #{nnclr_forward.1} parent=1 // pred_fallthru
      _
    // Predicated region
    $region42: #{nnclr_forward.1} parent=1 // pred_check
      _
    $region43: #{nnclr_forward.1} parent=1 // pred_check_branch
      %44 = sbr.rel (0) target = $region45
    $region44: #{nnclr_forward.1} parent=1 // pred_region
      _
    $region45: #{nnclr_forward.1} parent=1 // pred_fallthru
      _
    // Predicated region
    $region46: #{nnclr_forward.1} parent=1 // pred_check
      _
    $region47: #{nnclr_forward.1} parent=1 // pred_check_branch
      %46 = sbr.rel (0) target = $region49
    $region48: #{nnclr_forward.1} parent=1 // pred_region
      _
    $region49: #{nnclr_forward.1} parent=1 // pred_fallthru
      _
    // Predicated region
    $region50: #{nnclr_forward.1} parent=1 // pred_check
      _
    $region51: #{nnclr_forward.1} parent=1 // pred_check_branch
      %48 = sbr.rel (0) target = $region53
    $region52: #{nnclr_forward.1} parent=1 // pred_region
      _
    $region53: #{nnclr_forward.1} parent=1 // pred_fallthru
      _
    loop: start=0, step=1, limit=4
    $region54: #{nnclr_forward.1} parent=1 // loop_pre_header
      _
    $region55: #{nnclr_forward.1} parent=1 // loop_header
      %s51 = sphi 0, %s55
      %p52 = scmp.ge.s32.totalorder %s51, 4
      %v56 = vphi 0.0, %v251
    $region56: #{nnclr_forward.1} parent=1 // loop_header_branch
      %54 = sbr.rel (%p52) target = $region60
    $region57: #{nnclr_forward.1} parent=1 // loop_body
      %s57 = smul.u32 %s51, 64
      %s58 = sshra.s32 %s57, 3
      %s59 = sand.u32 %s57, 7
      %s60 = smul.addr %s58, 4
      %s61 = scalar_lea.vmem %s0, %s60
      %v62 = vld [vmem:[%s61] sm:$0xf]
      %v63 = vld [vmem:[%s61 + $0x4] sm:$0xf]
      %v64 = vld [vmem:[%s61 + $0x8] sm:$0xf]
      %v65 = vld [vmem:[%s61 + $0xc] sm:$0xf]
      %v66 = vld [vmem:[%s61 + $0x10] sm:$0xf]
      %v67 = vld [vmem:[%s61 + $0x14] sm:$0xf]
      %v68 = vld [vmem:[%s61 + $0x18] sm:$0xf]
      %v69 = vld [vmem:[%s61 + $0x1c] sm:$0xf]
      %v70 = vld [vmem:[%s1] sm:$0xf]
      %v71 = vld [vmem:[%s1 + $0x4] sm:$0xf]
      %v72 = vld [vmem:[%s1 + $0x8] sm:$0xf]
      %v73 = vld [vmem:[%s1 + $0xc] sm:$0xf]
      %v74 = vld [vmem:[%s1 + $0x10] sm:$0xf]
      %v75 = vld [vmem:[%s1 + $0x14] sm:$0xf]
      %v76 = vld [vmem:[%s1 + $0x18] sm:$0xf]
      %v77 = vld [vmem:[%s1 + $0x1c] sm:$0xf]
      %v78 = vld [vmem:[%s1 + $0x20] sm:$0xf]
      %v79 = vld [vmem:[%s1 + $0x24] sm:$0xf]
      %v80 = vld [vmem:[%s1 + $0x28] sm:$0xf]
      %v81 = vld [vmem:[%s1 + $0x2c] sm:$0xf]
      %v82 = vld [vmem:[%s1 + $0x30] sm:$0xf]
      %v83 = vld [vmem:[%s1 + $0x34] sm:$0xf]
      %v84 = vld [vmem:[%s1 + $0x38] sm:$0xf]
      %v85 = vld [vmem:[%s1 + $0x3c] sm:$0xf]
      %v86 = vld [vmem:[%s2] sm:$0x1]
      %v88 = vlaneseq
      %v89 = vshrl.u32 %v88, 7
      %v90 = vsub.s32 0, %v89
      %v91 = vrot.slane %v86, %v90
      %v101 = vunpack.c.l.b16 %v62
      %v102 = vunpack.c.l.b16 %v63
      %v103 = vunpack.c.l.b16 %v64
      %v104 = vunpack.c.l.b16 %v65
      %v105 = vunpack.c.l.b16 %v66
      %v106 = vunpack.c.l.b16 %v67
      %v107 = vunpack.c.l.b16 %v68
      %v108 = vunpack.c.l.b16 %v69
      %v109 = vpack.c.b16 %v102, %v101
      %v110 = vpack.c.b16 %v104, %v103
      %v111 = vpack.c.b16 %v106, %v105
      %v112 = vpack.c.b16 %v108, %v107
      %v133 = vunpack.c.l.b16 %v70
      %v134 = vunpack.c.l.b16 %v71
      %v135 = vunpack.c.l.b16 %v72
      %v136 = vunpack.c.l.b16 %v73
      %v137 = vunpack.c.l.b16 %v74
      %v138 = vunpack.c.l.b16 %v75
      %v139 = vunpack.c.l.b16 %v76
      %v140 = vunpack.c.l.b16 %v77
      %v141 = vunpack.c.l.b16 %v78
      %v142 = vunpack.c.l.b16 %v79
      %v143 = vunpack.c.l.b16 %v80
      %v144 = vunpack.c.l.b16 %v81
      %v145 = vunpack.c.l.b16 %v82
      %v146 = vunpack.c.l.b16 %v83
      %v147 = vunpack.c.l.b16 %v84
      %v148 = vunpack.c.l.b16 %v85
      %v149 = vpack.c.b16 %v134, %v133
      %v150 = vpack.c.b16 %v136, %v135
      %v151 = vpack.c.b16 %v138, %v137
      %v152 = vpack.c.b16 %v140, %v139
      %v153 = vpack.c.b16 %v142, %v141
      %v154 = vpack.c.b16 %v144, %v143
      %v155 = vpack.c.b16 %v146, %v145
      %v156 = vpack.c.b16 %v148, %v147
      %165 = vmatprep.subr.bf16.mxu0 0
      %166 = vmatpush1.bf16.msra.mxu0 %v156
      %167 = vmatprep.subr.bf16.mxu0 0
      %168 = vmatpush1.bf16.msra.mxu0 %v155
      %169 = vmatprep.subr.bf16.mxu0 0
      %170 = vmatpush1.bf16.msra.mxu0 %v154
      %171 = vmatprep.subr.bf16.mxu0 0
      %172 = vmatpush1.bf16.msra.mxu0 %v153
      %173 = vmatprep.subr.bf16.mxu0 0
      %174 = vmatpush1.bf16.msra.mxu0 %v152
      %175 = vmatprep.subr.bf16.mxu0 0
      %176 = vmatpush1.bf16.msra.mxu0 %v151
      %177 = vmatprep.subr.bf16.mxu0 0
      %178 = vmatpush1.bf16.msra.mxu0 %v150
      %179 = vmatprep.subr.bf16.mxu0 0
      %180 = vmatpush1.bf16.msra.mxu0 %v149
      %181 = vmatprep.subr.bf16.mxu0 0
      %182 = vmatpush2.bf16.msra.mxu0 0
      %183 = vmatprep.subr.bf16.mxu0 0
      %184 = vmatpush2.bf16.msra.mxu0 0
      %185 = vmatprep.subr.bf16.mxu0 0
      %186 = vmatpush2.bf16.msra.mxu0 0
      %187 = vmatprep.subr.bf16.mxu0 0
      %188 = vmatpush2.bf16.msra.mxu0 0
      %189 = vmatprep.subr.bf16.mxu0 0
      %190 = vmatpush2.bf16.msra.mxu0 0
      %191 = vmatprep.subr.bf16.mxu0 0
      %192 = vmatpush2.bf16.msra.mxu0 0
      %193 = vmatprep.subr.bf16.mxu0 0
      %194 = vmatpush2.bf16.msra.mxu0 0
      %195 = vmatprep.subr.bf16.mxu0 0
      %196 = vmatpush2.bf16.msra.mxu0 0
      %197 = vmatprep.mubr.bf16.mxu0 0
      %198 = vmatmul.mubr.bf16.gmra.mxu0 %v109
      %v199 = vpop.f32.mrf.mxu0
      %v200 = vadd.f32 %v91, %v199
      %v201 = vpop.f32.mrf.mxu0
      %v202 = vpop.f32.mrf.mxu0
      %v203 = vadd.f32 %v91, %v202
      %v204 = vpop.f32.mrf.mxu0
      %205 = vmatprep.mubr.bf16.mxu0 0
      %206 = vmatmul.mubr.bf16.gmra.mxu0 %v110
      %v207 = vpop.f32.mrf.mxu0
      %v208 = vadd.f32 %v91, %v207
      %v209 = vpop.f32.mrf.mxu0
      %v210 = vpop.f32.mrf.mxu0
      %v211 = vadd.f32 %v91, %v210
      %v212 = vpop.f32.mrf.mxu0
      %213 = vmatprep.mubr.bf16.mxu0 0
      %214 = vmatmul.mubr.bf16.gmra.mxu0 %v111
      %v215 = vpop.f32.mrf.mxu0
      %v216 = vadd.f32 %v91, %v215
      %v217 = vpop.f32.mrf.mxu0
      %v218 = vpop.f32.mrf.mxu0
      %v219 = vadd.f32 %v91, %v218
      %v220 = vpop.f32.mrf.mxu0
      %221 = vmatprep.mubr.bf16.mxu0 0
      %222 = vmatmul.mubr.bf16.gmra.mxu0 %v112
      %v223 = vpop.f32.mrf.mxu0
      %v224 = vadd.f32 %v91, %v223
      %v225 = vpop.f32.mrf.mxu0
      %v226 = vpop.f32.mrf.mxu0
      %v227 = vadd.f32 %v91, %v226
      %v228 = vpop.f32.mrf.mxu0
      %229 = vdwg.mxu0
      %v230 = vmax.f32 %v200, 0.0
      %v231 = vmax.f32 %v203, 0.0
      %v232 = vmax.f32 %v208, 0.0
      %v233 = vmax.f32 %v211, 0.0
      %v234 = vmax.f32 %v216, 0.0
      %v235 = vmax.f32 %v219, 0.0
      %v236 = vmax.f32 %v224, 0.0
      %v237 = vmax.f32 %v227, 0.0
      %v238 = vadd.f32 %v230, %v231
      %v239 = vadd.f32 %v238, %v232
      %v240 = vadd.f32 %v239, %v233
      %v241 = vadd.f32 %v240, %v234
      %v242 = vadd.f32 %v241, %v235
      %v243 = vadd.f32 %v242, %v236
      %v244 = vadd.f32 %v243, %v237
      %v245 = vrot.slane %v244, 4
      %v246 = vadd.f32 %v244, %v245
      %v247 = vrot.slane %v246, 2
      %v248 = vadd.f32 %v246, %v247
      %v249 = vrot.slane %v248, 1
      %v250 = vadd.f32 %v248, %v249
      %v251 = vadd.f32 %v56, %v250
    $region58: #{nnclr_forward.1} parent=1 // loop_footer
      %s55 = sadd.s32 1, %s51
    $region59: #{nnclr_forward.1} parent=1 // loop_footer_branch
      %50 = sbr.rel target = $region55
    $region60: #{nnclr_forward.1} parent=1 // loop_exit
      _
    loop: start=0, step=1, limit=4
    $region61: #{nnclr_forward.1} parent=1 // loop_pre_header
      _
    $region62: #{nnclr_forward.1} parent=1 // loop_header
      %s253 = sphi 0, %s257
      %p254 = scmp.ge.s32.totalorder %s253, 4
      %v258 = vphi 0.0, %v454
    $region63: #{nnclr_forward.1} parent=1 // loop_header_branch
      %256 = sbr.rel (%p254) target = $region67
    $region64: #{nnclr_forward.1} parent=1 // loop_body
      %s259 = smul.u32 %s253, 64
      %s260 = sadd.s32 %s259, 256
      %s261 = sshra.s32 %s260, 3
      %s262 = sand.u32 %s260, 7
      %s263 = smul.addr %s261, 4
      %s264 = scalar_lea.vmem %s0, %s263
      %v265 = vld [vmem:[%s264] sm:$0xf]
      %v266 = vld [vmem:[%s264 + $0x4] sm:$0xf]
      %v267 = vld [vmem:[%s264 + $0x8] sm:$0xf]
      %v268 = vld [vmem:[%s264 + $0xc] sm:$0xf]
      %v269 = vld [vmem:[%s264 + $0x10] sm:$0xf]
      %v270 = vld [vmem:[%s264 + $0x14] sm:$0xf]
      %v271 = vld [vmem:[%s264 + $0x18] sm:$0xf]
      %v272 = vld [vmem:[%s264 + $0x1c] sm:$0xf]
      %v273 = vld [vmem:[%s1] sm:$0xf]
      %v274 = vld [vmem:[%s1 + $0x4] sm:$0xf]
      %v275 = vld [vmem:[%s1 + $0x8] sm:$0xf]
      %v276 = vld [vmem:[%s1 + $0xc] sm:$0xf]
      %v277 = vld [vmem:[%s1 + $0x10] sm:$0xf]
      %v278 = vld [vmem:[%s1 + $0x14] sm:$0xf]
      %v279 = vld [vmem:[%s1 + $0x18] sm:$0xf]
      %v280 = vld [vmem:[%s1 + $0x1c] sm:$0xf]
      %v281 = vld [vmem:[%s1 + $0x20] sm:$0xf]
      %v282 = vld [vmem:[%s1 + $0x24] sm:$0xf]
      %v283 = vld [vmem:[%s1 + $0x28] sm:$0xf]
      %v284 = vld [vmem:[%s1 + $0x2c] sm:$0xf]
      %v285 = vld [vmem:[%s1 + $0x30] sm:$0xf]
      %v286 = vld [vmem:[%s1 + $0x34] sm:$0xf]
      %v287 = vld [vmem:[%s1 + $0x38] sm:$0xf]
      %v288 = vld [vmem:[%s1 + $0x3c] sm:$0xf]
      %v289 = vld [vmem:[%s2] sm:$0x1]
      %v291 = vlaneseq
      %v292 = vshrl.u32 %v291, 7
      %v293 = vsub.s32 0, %v292
      %v294 = vrot.slane %v289, %v293
      %v304 = vunpack.c.l.b16 %v265
      %v305 = vunpack.c.l.b16 %v266
      %v306 = vunpack.c.l.b16 %v267
      %v307 = vunpack.c.l.b16 %v268
      %v308 = vunpack.c.l.b16 %v269
      %v309 = vunpack.c.l.b16 %v270
      %v310 = vunpack.c.l.b16 %v271
      %v311 = vunpack.c.l.b16 %v272
      %v312 = vpack.c.b16 %v305, %v304
      %v313 = vpack.c.b16 %v307, %v306
      %v314 = vpack.c.b16 %v309, %v308
      %v315 = vpack.c.b16 %v311, %v310
      %v336 = vunpack.c.l.b16 %v273
      %v337 = vunpack.c.l.b16 %v274
      %v338 = vunpack.c.l.b16 %v275
      %v339 = vunpack.c.l.b16 %v276
      %v340 = vunpack.c.l.b16 %v277
      %v341 = vunpack.c.l.b16 %v278
      %v342 = vunpack.c.l.b16 %v279
      %v343 = vunpack.c.l.b16 %v280
      %v344 = vunpack.c.l.b16 %v281
      %v345 = vunpack.c.l.b16 %v282
      %v346 = vunpack.c.l.b16 %v283
      %v347 = vunpack.c.l.b16 %v284
      %v348 = vunpack.c.l.b16 %v285
      %v349 = vunpack.c.l.b16 %v286
      %v350 = vunpack.c.l.b16 %v287
      %v351 = vunpack.c.l.b16 %v288
      %v352 = vpack.c.b16 %v337, %v336
      %v353 = vpack.c.b16 %v339, %v338
      %v354 = vpack.c.b16 %v341, %v340
      %v355 = vpack.c.b16 %v343, %v342
      %v356 = vpack.c.b16 %v345, %v344
      %v357 = vpack.c.b16 %v347, %v346
      %v358 = vpack.c.b16 %v349, %v348
      %v359 = vpack.c.b16 %v351, %v350
      %368 = vmatprep.subr.bf16.mxu0 0
      %369 = vmatpush1.bf16.msra.mxu0 %v359
      %370 = vmatprep.subr.bf16.mxu0 0
      %371 = vmatpush1.bf16.msra.mxu0 %v358
      %372 = vmatprep.subr.bf16.mxu0 0
      %373 = vmatpush1.bf16.msra.mxu0 %v357
      %374 = vmatprep.subr.bf16.mxu0 0
      %375 = vmatpush1.bf16.msra.mxu0 %v356
      %376 = vmatprep.subr.bf16.mxu0 0
      %377 = vmatpush1.bf16.msra.mxu0 %v355
      %378 = vmatprep.subr.bf16.mxu0 0
      %379 = vmatpush1.bf16.msra.mxu0 %v354
      %380 = vmatprep.subr.bf16.mxu0 0
      %381 = vmatpush1.bf16.msra.mxu0 %v353
      %382 = vmatprep.subr.bf16.mxu0 0
      %383 = vmatpush1.bf16.msra.mxu0 %v352
      %384 = vmatprep.subr.bf16.mxu0 0
      %385 = vmatpush2.bf16.msra.mxu0 0
      %386 = vmatprep.subr.bf16.mxu0 0
      %387 = vmatpush2.bf16.msra.mxu0 0
      %388 = vmatprep.subr.bf16.mxu0 0
      %389 = vmatpush2.bf16.msra.mxu0 0
      %390 = vmatprep.subr.bf16.mxu0 0
      %391 = vmatpush2.bf16.msra.mxu0 0
      %392 = vmatprep.subr.bf16.mxu0 0
      %393 = vmatpush2.bf16.msra.mxu0 0
      %394 = vmatprep.subr.bf16.mxu0 0
      %395 = vmatpush2.bf16.msra.mxu0 0
      %396 = vmatprep.subr.bf16.mxu0 0
      %397 = vmatpush2.bf16.msra.mxu0 0
      %398 = vmatprep.subr.bf16.mxu0 0
      %399 = vmatpush2.bf16.msra.mxu0 0
      %400 = vmatprep.mubr.bf16.mxu0 0
      %401 = vmatmul.mubr.bf16.gmra.mxu0 %v312
      %v402 = vpop.f32.mrf.mxu0
      %v403 = vadd.f32 %v294, %v402
      %v404 = vpop.f32.mrf.mxu0
      %v405 = vpop.f32.mrf.mxu0
      %v406 = vadd.f32 %v294, %v405
      %v407 = vpop.f32.mrf.mxu0
      %408 = vmatprep.mubr.bf16.mxu0 0
      %409 = vmatmul.mubr.bf16.gmra.mxu0 %v313
      %v410 = vpop.f32.mrf.mxu0
      %v411 = vadd.f32 %v294, %v410
      %v412 = vpop.f32.mrf.mxu0
      %v413 = vpop.f32.mrf.mxu0
      %v414 = vadd.f32 %v294, %v413
      %v415 = vpop.f32.mrf.mxu0
      %416 = vmatprep.mubr.bf16.mxu0 0
      %417 = vmatmul.mubr.bf16.gmra.mxu0 %v314
      %v418 = vpop.f32.mrf.mxu0
      %v419 = vadd.f32 %v294, %v418
      %v420 = vpop.f32.mrf.mxu0
      %v421 = vpop.f32.mrf.mxu0
      %v422 = vadd.f32 %v294, %v421
      %v423 = vpop.f32.mrf.mxu0
      %424 = vmatprep.mubr.bf16.mxu0 0
      %425 = vmatmul.mubr.bf16.gmra.mxu0 %v315
      %v426 = vpop.f32.mrf.mxu0
      %v427 = vadd.f32 %v294, %v426
      %v428 = vpop.f32.mrf.mxu0
      %v429 = vpop.f32.mrf.mxu0
      %v430 = vadd.f32 %v294, %v429
      %v431 = vpop.f32.mrf.mxu0
      %432 = vdwg.mxu0
      %v433 = vmax.f32 %v403, 0.0
      %v434 = vmax.f32 %v406, 0.0
      %v435 = vmax.f32 %v411, 0.0
      %v436 = vmax.f32 %v414, 0.0
      %v437 = vmax.f32 %v419, 0.0
      %v438 = vmax.f32 %v422, 0.0
      %v439 = vmax.f32 %v427, 0.0
      %v440 = vmax.f32 %v430, 0.0
      %v441 = vadd.f32 %v433, %v434
      %v442 = vadd.f32 %v441, %v435
      %v443 = vadd.f32 %v442, %v436
      %v444 = vadd.f32 %v443, %v437
      %v445 = vadd.f32 %v444, %v438
      %v446 = vadd.f32 %v445, %v439
      %v447 = vadd.f32 %v446, %v440
      %v448 = vrot.slane %v447, 4
      %v449 = vadd.f32 %v447, %v448
      %v450 = vrot.slane %v449, 2
      %v451 = vadd.f32 %v449, %v450
      %v452 = vrot.slane %v451, 1
      %v453 = vadd.f32 %v451, %v452
      %v454 = vadd.f32 %v258, %v453
    $region65: #{nnclr_forward.1} parent=1 // loop_footer
      %s257 = sadd.s32 1, %s253
    $region66: #{nnclr_forward.1} parent=1 // loop_footer_branch
      %252 = sbr.rel target = $region62
    $region67: #{nnclr_forward.1} parent=1 // loop_exit
      _
    %vm455 = vcmask 1040384
    %v456 = vsel %vm455, %v56, %v258
    %v457 = vmul.f32 %v456, 0.00390625
    %458 = vst [vmem:[#allocation4] sm:$0x3] %v457
    %v459 = vpack.c.bf16 %v457, %v457
    %v460 = vld [vmem:[%s3] sm:$0xf]
    %v461 = vld [vmem:[%s3 + $0x4] sm:$0xf]
    %v462 = vld [vmem:[%s3 + $0x8] sm:$0xf]
    %v463 = vld [vmem:[%s3 + $0xc] sm:$0xf]
    %v464 = vld [vmem:[%s3 + $0x10] sm:$0xf]
    %v465 = vld [vmem:[%s3 + $0x14] sm:$0xf]
    %v466 = vld [vmem:[%s3 + $0x18] sm:$0xf]
    %v467 = vld [vmem:[%s3 + $0x1c] sm:$0xf]
    %v468 = vld [vmem:[%s3 + $0x20] sm:$0xf]
    %v469 = vld [vmem:[%s3 + $0x24] sm:$0xf]
    %v470 = vld [vmem:[%s3 + $0x28] sm:$0xf]
    %v471 = vld [vmem:[%s3 + $0x2c] sm:$0xf]
    %v472 = vld [vmem:[%s3 + $0x30] sm:$0xf]
    %v473 = vld [vmem:[%s3 + $0x34] sm:$0xf]
    %v474 = vld [vmem:[%s3 + $0x38] sm:$0xf]
    %v475 = vld [vmem:[%s3 + $0x3c] sm:$0xf]
    %v476 = vld [vmem:[%s4] sm:$0x1]
    %v478 = vlaneseq
    %v479 = vshrl.u32 %v478, 7
    %v480 = vsub.s32 0, %v479
    %v481 = vrot.slane %v476, %v480
    %v499 = vunpack.c.l.b16 %v460
    %v500 = vunpack.c.l.b16 %v461
    %v501 = vunpack.c.l.b16 %v462
    %v502 = vunpack.c.l.b16 %v463
    %v503 = vunpack.c.l.b16 %v464
    %v504 = vunpack.c.l.b16 %v465
    %v505 = vunpack.c.l.b16 %v466
    %v506 = vunpack.c.l.b16 %v467
    %v507 = vunpack.c.l.b16 %v468
    %v508 = vunpack.c.l.b16 %v469
    %v509 = vunpack.c.l.b16 %v470
    %v510 = vunpack.c.l.b16 %v471
    %v511 = vunpack.c.l.b16 %v472
    %v512 = vunpack.c.l.b16 %v473
    %v513 = vunpack.c.l.b16 %v474
    %v514 = vunpack.c.l.b16 %v475
    %v515 = vpack.c.b16 %v500, %v499
    %v516 = vpack.c.b16 %v502, %v501
    %v517 = vpack.c.b16 %v504, %v503
    %v518 = vpack.c.b16 %v506, %v505
    %v519 = vpack.c.b16 %v508, %v507
    %v520 = vpack.c.b16 %v510, %v509
    %v521 = vpack.c.b16 %v512, %v511
    %v522 = vpack.c.b16 %v514, %v513
    %531 = vmatprep.subr.bf16.mxu0 0
    %532 = vmatpush1.bf16.msra.mxu0 %v522
    %533 = vmatprep.subr.bf16.mxu0 0
    %534 = vmatpush1.bf16.msra.mxu0 %v521
    %535 = vmatprep.subr.bf16.mxu0 0
    %536 = vmatpush1.bf16.msra.mxu0 %v520
    %537 = vmatprep.subr.bf16.mxu0 0
    %538 = vmatpush1.bf16.msra.mxu0 %v519
    %539 = vmatprep.subr.bf16.mxu0 0
    %540 = vmatpush1.bf16.msra.mxu0 %v518
    %541 = vmatprep.subr.bf16.mxu0 0
    %542 = vmatpush1.bf16.msra.mxu0 %v517
    %543 = vmatprep.subr.bf16.mxu0 0
    %544 = vmatpush1.bf16.msra.mxu0 %v516
    %545 = vmatprep.subr.bf16.mxu0 0
    %546 = vmatpush1.bf16.msra.mxu0 %v515
    %547 = vmatprep.subr.bf16.mxu0 0
    %548 = vmatpush2.bf16.msra.mxu0 0
    %549 = vmatprep.subr.bf16.mxu0 0
    %550 = vmatpush2.bf16.msra.mxu0 0
    %551 = vmatprep.subr.bf16.mxu0 0
    %552 = vmatpush2.bf16.msra.mxu0 0
    %553 = vmatprep.subr.bf16.mxu0 0
    %554 = vmatpush2.bf16.msra.mxu0 0
    %555 = vmatprep.subr.bf16.mxu0 0
    %556 = vmatpush2.bf16.msra.mxu0 0
    %557 = vmatprep.subr.bf16.mxu0 0
    %558 = vmatpush2.bf16.msra.mxu0 0
    %559 = vmatprep.subr.bf16.mxu0 0
    %560 = vmatpush2.bf16.msra.mxu0 0
    %561 = vmatprep.subr.bf16.mxu0 0
    %562 = vmatpush2.bf16.msra.mxu0 0
    %563 = vmatprep.mubr.bf16.mxu0 0
    %564 = vmatmul.mubr.bf16.gmra.mxu0 %v459
    %v565 = vpop.f32.mrf.mxu0
    %v566 = vadd.f32 %v481, %v565
    %v567 = vpop.f32.mrf.mxu0
    %v568 = vpop.f32.mrf.mxu0
    %v569 = vpop.f32.mrf.mxu0
    %570 = vdwg.mxu0
    %v571 = vmax.f32 %v566, 0.0
    %v572 = vpack.c.bf16 %v571, %v571
    %v573 = vld [vmem:[%s5] sm:$0xf]
    %v574 = vld [vmem:[%s5 + $0x4] sm:$0xf]
    %v575 = vld [vmem:[%s5 + $0x8] sm:$0xf]
    %v576 = vld [vmem:[%s5 + $0xc] sm:$0xf]
    %v577 = vld [vmem:[%s5 + $0x10] sm:$0xf]
    %v578 = vld [vmem:[%s5 + $0x14] sm:$0xf]
    %v579 = vld [vmem:[%s5 + $0x18] sm:$0xf]
    %v580 = vld [vmem:[%s5 + $0x1c] sm:$0xf]
    %v581 = vld [vmem:[%s5 + $0x20] sm:$0xf]
    %v582 = vld [vmem:[%s5 + $0x24] sm:$0xf]
    %v583 = vld [vmem:[%s5 + $0x28] sm:$0xf]
    %v584 = vld [vmem:[%s5 + $0x2c] sm:$0xf]
    %v585 = vld [vmem:[%s5 + $0x30] sm:$0xf]
    %v586 = vld [vmem:[%s5 + $0x34] sm:$0xf]
    %v587 = vld [vmem:[%s5 + $0x38] sm:$0xf]
    %v588 = vld [vmem:[%s5 + $0x3c] sm:$0xf]
    %v589 = vld [vmem:[%s6] sm:$0x1]
    %v591 = vlaneseq
    %v592 = vshrl.u32 %v591, 7
    %v593 = vsub.s32 0, %v592
    %v594 = vrot.slane %v589, %v593
    %v612 = vunpack.c.l.b16 %v573
    %v613 = vunpack.c.l.b16 %v574
    %v614 = vunpack.c.l.b16 %v575
    %v615 = vunpack.c.l.b16 %v576
    %v616 = vunpack.c.l.b16 %v577
    %v617 = vunpack.c.l.b16 %v578
    %v618 = vunpack.c.l.b16 %v579
    %v619 = vunpack.c.l.b16 %v580
    %v620 = vunpack.c.l.b16 %v581
    %v621 = vunpack.c.l.b16 %v582
    %v622 = vunpack.c.l.b16 %v583
    %v623 = vunpack.c.l.b16 %v584
    %v624 = vunpack.c.l.b16 %v585
    %v625 = vunpack.c.l.b16 %v586
    %v626 = vunpack.c.l.b16 %v587
    %v627 = vunpack.c.l.b16 %v588
    %v628 = vpack.c.b16 %v613, %v612
    %v629 = vpack.c.b16 %v615, %v614
    %v630 = vpack.c.b16 %v617, %v616
    %v631 = vpack.c.b16 %v619, %v618
    %v632 = vpack.c.b16 %v621, %v620
    %v633 = vpack.c.b16 %v623, %v622
    %v634 = vpack.c.b16 %v625, %v624
    %v635 = vpack.c.b16 %v627, %v626
    %644 = vmatprep.subr.bf16.mxu0 0
    %645 = vmatpush1.bf16.msra.mxu0 %v635
    %646 = vmatprep.subr.bf16.mxu0 0
    %647 = vmatpush1.bf16.msra.mxu0 %v634
    %648 = vmatprep.subr.bf16.mxu0 0
    %649 = vmatpush1.bf16.msra.mxu0 %v633
    %650 = vmatprep.subr.bf16.mxu0 0
    %651 = vmatpush1.bf16.msra.mxu0 %v632
    %652 = vmatprep.subr.bf16.mxu0 0
    %653 = vmatpush1.bf16.msra.mxu0 %v631
    %654 = vmatprep.subr.bf16.mxu0 0
    %655 = vmatpush1.bf16.msra.mxu0 %v630
    %656 = vmatprep.subr.bf16.mxu0 0
    %657 = vmatpush1.bf16.msra.mxu0 %v629
    %658 = vmatprep.subr.bf16.mxu0 0
    %659 = vmatpush1.bf16.msra.mxu0 %v628
    %660 = vmatprep.subr.bf16.mxu0 0
    %661 = vmatpush2.bf16.msra.mxu0 0
    %662 = vmatprep.subr.bf16.mxu0 0
    %663 = vmatpush2.bf16.msra.mxu0 0
    %664 = vmatprep.subr.bf16.mxu0 0
    %665 = vmatpush2.bf16.msra.mxu0 0
    %666 = vmatprep.subr.bf16.mxu0 0
    %667 = vmatpush2.bf16.msra.mxu0 0
    %668 = vmatprep.subr.bf16.mxu0 0
    %669 = vmatpush2.bf16.msra.mxu0 0
    %670 = vmatprep.subr.bf16.mxu0 0
    %671 = vmatpush2.bf16.msra.mxu0 0
    %672 = vmatprep.subr.bf16.mxu0 0
    %673 = vmatpush2.bf16.msra.mxu0 0
    %674 = vmatprep.subr.bf16.mxu0 0
    %675 = vmatpush2.bf16.msra.mxu0 0
    %676 = vmatprep.mubr.bf16.mxu0 0
    %677 = vmatmul.mubr.bf16.gmra.mxu0 %v572
    %v678 = vpop.f32.mrf.mxu0
    %v679 = vadd.f32 %v594, %v678
    %v680 = vpop.f32.mrf.mxu0
    %v681 = vpop.f32.mrf.mxu0
    %v682 = vpop.f32.mrf.mxu0
    %683 = vdwg.mxu0
    %684 = vst [vmem:[#allocation2] sm:$0x3] %v679
    %v685 = vpack.c.bf16 %v679, %v679
    %v686 = vld [vmem:[%s7] sm:$0xff]
    %v687 = vld [vmem:[%s7 + $0x8] sm:$0xff]
    %v688 = vld [vmem:[%s7 + $0x10] sm:$0xff]
    %v689 = vld [vmem:[%s7 + $0x18] sm:$0xff]
    %v690 = vld [vmem:[%s7 + $0x20] sm:$0xff]
    %v691 = vld [vmem:[%s7 + $0x28] sm:$0xff]
    %v692 = vld [vmem:[%s7 + $0x30] sm:$0xff]
    %v693 = vld [vmem:[%s7 + $0x38] sm:$0xff]
    %v694 = vld [vmem:[%s7 + $0x40] sm:$0xff]
    %v695 = vld [vmem:[%s7 + $0x48] sm:$0xff]
    %v696 = vld [vmem:[%s7 + $0x50] sm:$0xff]
    %v697 = vld [vmem:[%s7 + $0x58] sm:$0xff]
    %v698 = vld [vmem:[%s7 + $0x60] sm:$0xff]
    %v699 = vld [vmem:[%s7 + $0x68] sm:$0xff]
    %v700 = vld [vmem:[%s7 + $0x70] sm:$0xff]
    %v701 = vld [vmem:[%s7 + $0x78] sm:$0xff]
    %v702 = vld [vmem:[%s7 + $0x80] sm:$0xff]
    %v703 = vld [vmem:[%s7 + $0x88] sm:$0xff]
    %v704 = vld [vmem:[%s7 + $0x90] sm:$0xff]
    %v705 = vld [vmem:[%s7 + $0x98] sm:$0xff]
    %v706 = vld [vmem:[%s7 + $0xa0] sm:$0xff]
    %v707 = vld [vmem:[%s7 + $0xa8] sm:$0xff]
    %v708 = vld [vmem:[%s7 + $0xb0] sm:$0xff]
    %v709 = vld [vmem:[%s7 + $0xb8] sm:$0xff]
    %v710 = vld [vmem:[%s7 + $0xc0] sm:$0xff]
    %v711 = vld [vmem:[%s7 + $0xc8] sm:$0xff]
    %v712 = vld [vmem:[%s7 + $0xd0] sm:$0xff]
    %v713 = vld [vmem:[%s7 + $0xd8] sm:$0xff]
    %v714 = vld [vmem:[%s7 + $0xe0] sm:$0xff]
    %v715 = vld [vmem:[%s7 + $0xe8] sm:$0xff]
    %v716 = vld [vmem:[%s7 + $0xf0] sm:$0xff]
    %v717 = vld [vmem:[%s7 + $0xf8] sm:$0xff]
    %v718 = vld [vmem:[%s8] sm:$0xff]
    %v719 = vld [vmem:[%s8 + $0x8] sm:$0xff]
    %v722 = vlaneseq
    %v723 = vshrl.u32 %v722, 7
    %v724 = vsub.s32 0, %v723
    %v725 = vrot.slane %v718, %v724
    %v726 = vlaneseq
    %v727 = vshrl.u32 %v726, 7
    %v728 = vsub.s32 1, %v727
    %v729 = vrot.slane %v718, %v728
    %v730 = vlaneseq
    %v731 = vshrl.u32 %v730, 7
    %v732 = vsub.s32 2, %v731
    %v733 = vrot.slane %v718, %v732
    %v734 = vlaneseq
    %v735 = vshrl.u32 %v734, 7
    %v736 = vsub.s32 3, %v735
    %v737 = vrot.slane %v718, %v736
    %v738 = vlaneseq
    %v739 = vshrl.u32 %v738, 7
    %v740 = vsub.s32 4, %v739
    %v741 = vrot.slane %v718, %v740
    %v742 = vlaneseq
    %v743 = vshrl.u32 %v742, 7
    %v744 = vsub.s32 5, %v743
    %v745 = vrot.slane %v718, %v744
    %v746 = vlaneseq
    %v747 = vshrl.u32 %v746, 7
    %v748 = vsub.s32 6, %v747
    %v749 = vrot.slane %v718, %v748
    %v750 = vlaneseq
    %v751 = vshrl.u32 %v750, 7
    %v752 = vsub.s32 7, %v751
    %v753 = vrot.slane %v718, %v752
    %v754 = vlaneseq
    %v755 = vshrl.u32 %v754, 7
    %v756 = vsub.s32 0, %v755
    %v757 = vrot.slane %v719, %v756
    %v758 = vlaneseq
    %v759 = vshrl.u32 %v758, 7
    %v760 = vsub.s32 1, %v759
    %v761 = vrot.slane %v719, %v760
    %v762 = vlaneseq
    %v763 = vshrl.u32 %v762, 7
    %v764 = vsub.s32 2, %v763
    %v765 = vrot.slane %v719, %v764
    %v766 = vlaneseq
    %v767 = vshrl.u32 %v766, 7
    %v768 = vsub.s32 3, %v767
    %v769 = vrot.slane %v719, %v768
    %v770 = vlaneseq
    %v771 = vshrl.u32 %v770, 7
    %v772 = vsub.s32 4, %v771
    %v773 = vrot.slane %v719, %v772
    %v774 = vlaneseq
    %v775 = vshrl.u32 %v774, 7
    %v776 = vsub.s32 5, %v775
    %v777 = vrot.slane %v719, %v776
    %v778 = vlaneseq
    %v779 = vshrl.u32 %v778, 7
    %v780 = vsub.s32 6, %v779
    %v781 = vrot.slane %v719, %v780
    %v782 = vlaneseq
    %v783 = vshrl.u32 %v782, 7
    %v784 = vsub.s32 7, %v783
    %v785 = vrot.slane %v719, %v784
    %v834 = vunpack.c.l.b16 %v686
    %v835 = vunpack.c.h.b16 %v686
    %v836 = vunpack.c.l.b16 %v687
    %v837 = vunpack.c.h.b16 %v687
    %v838 = vunpack.c.l.b16 %v688
    %v839 = vunpack.c.h.b16 %v688
    %v840 = vunpack.c.l.b16 %v689
    %v841 = vunpack.c.h.b16 %v689
    %v842 = vunpack.c.l.b16 %v690
    %v843 = vunpack.c.h.b16 %v690
    %v844 = vunpack.c.l.b16 %v691
    %v845 = vunpack.c.h.b16 %v691
    %v846 = vunpack.c.l.b16 %v692
    %v847 = vunpack.c.h.b16 %v692
    %v848 = vunpack.c.l.b16 %v693
    %v849 = vunpack.c.h.b16 %v693
    %v850 = vunpack.c.l.b16 %v694
    %v851 = vunpack.c.h.b16 %v694
    %v852 = vunpack.c.l.b16 %v695
    %v853 = vunpack.c.h.b16 %v695
    %v854 = vunpack.c.l.b16 %v696
    %v855 = vunpack.c.h.b16 %v696
    %v856 = vunpack.c.l.b16 %v697
    %v857 = vunpack.c.h.b16 %v697
    %v858 = vunpack.c.l.b16 %v698
    %v859 = vunpack.c.h.b16 %v698
    %v860 = vunpack.c.l.b16 %v699
    %v861 = vunpack.c.h.b16 %v699
    %v862 = vunpack.c.l.b16 %v700
    %v863 = vunpack.c.h.b16 %v700
    %v864 = vunpack.c.l.b16 %v701
    %v865 = vunpack.c.h.b16 %v701
    %v866 = vunpack.c.l.b16 %v702
    %v867 = vunpack.c.h.b16 %v702
    %v868 = vunpack.c.l.b16 %v703
    %v869 = vunpack.c.h.b16 %v703
    %v870 = vunpack.c.l.b16 %v704
    %v871 = vunpack.c.h.b16 %v704
    %v872 = vunpack.c.l.b16 %v705
    %v873 = vunpack.c.h.b16 %v705
    %v874 = vunpack.c.l.b16 %v706
    %v875 = vunpack.c.h.b16 %v706
    %v876 = vunpack.c.l.b16 %v707
    %v877 = vunpack.c.h.b16 %v707
    %v878 = vunpack.c.l.b16 %v708
    %v879 = vunpack.c.h.b16 %v708
    %v880 = vunpack.c.l.b16 %v709
    %v881 = vunpack.c.h.b16 %v709
    %v882 = vunpack.c.l.b16 %v710
    %v883 = vunpack.c.h.b16 %v710
    %v884 = vunpack.c.l.b16 %v711
    %v885 = vunpack.c.h.b16 %v711
    %v886 = vunpack.c.l.b16 %v712
    %v887 = vunpack.c.h.b16 %v712
    %v888 = vunpack.c.l.b16 %v713
    %v889 = vunpack.c.h.b16 %v713
    %v890 = vunpack.c.l.b16 %v714
    %v891 = vunpack.c.h.b16 %v714
    %v892 = vunpack.c.l.b16 %v715
    %v893 = vunpack.c.h.b16 %v715
    %v894 = vunpack.c.l.b16 %v716
    %v895 = vunpack.c.h.b16 %v716
    %v896 = vunpack.c.l.b16 %v717
    %v897 = vunpack.c.h.b16 %v717
    %v898 = vpack.c.b16 %v850, %v834
    %v899 = vpack.c.b16 %v851, %v835
    %v900 = vpack.c.b16 %v852, %v836
    %v901 = vpack.c.b16 %v853, %v837
    %v902 = vpack.c.b16 %v854, %v838
    %v903 = vpack.c.b16 %v855, %v839
    %v904 = vpack.c.b16 %v856, %v840
    %v905 = vpack.c.b16 %v857, %v841
    %v906 = vpack.c.b16 %v858, %v842
    %v907 = vpack.c.b16 %v859, %v843
    %v908 = vpack.c.b16 %v860, %v844
    %v909 = vpack.c.b16 %v861, %v845
    %v910 = vpack.c.b16 %v862, %v846
    %v911 = vpack.c.b16 %v863, %v847
    %v912 = vpack.c.b16 %v864, %v848
    %v913 = vpack.c.b16 %v865, %v849
    %v914 = vpack.c.b16 %v882, %v866
    %v915 = vpack.c.b16 %v883, %v867
    %v916 = vpack.c.b16 %v884, %v868
    %v917 = vpack.c.b16 %v885, %v869
    %v918 = vpack.c.b16 %v886, %v870
    %v919 = vpack.c.b16 %v887, %v871
    %v920 = vpack.c.b16 %v888, %v872
    %v921 = vpack.c.b16 %v889, %v873
    %v922 = vpack.c.b16 %v890, %v874
    %v923 = vpack.c.b16 %v891, %v875
    %v924 = vpack.c.b16 %v892, %v876
    %v925 = vpack.c.b16 %v893, %v877
    %v926 = vpack.c.b16 %v894, %v878
    %v927 = vpack.c.b16 %v895, %v879
    %v928 = vpack.c.b16 %v896, %v880
    %v929 = vpack.c.b16 %v897, %v881
    %vm962 = vcmask 261120
    %v964 = vsel %vm962, %v685, 0
    %966 = vmatprep.subr.bf16.mxu0 0
    %967 = vmatpush1.bf16.msra.mxu0 0
    %968 = vmatprep.subr.bf16.mxu0 0
    %969 = vmatpush1.bf16.msra.mxu0 0
    %970 = vmatprep.subr.bf16.mxu0 0
    %971 = vmatpush1.bf16.msra.mxu0 0
    %972 = vmatprep.subr.bf16.mxu0 0
    %973 = vmatpush1.bf16.msra.mxu0 0
    %974 = vmatprep.subr.bf16.mxu0 0
    %975 = vmatpush1.bf16.msra.mxu0 0
    %976 = vmatprep.subr.bf16.mxu0 0
    %977 = vmatpush1.bf16.msra.mxu0 0
    %978 = vmatprep.subr.bf16.mxu0 %v915
    %979 = vmatpush1.bf16.msra.mxu0 %v914
    %980 = vmatprep.subr.bf16.mxu0 %v899
    %981 = vmatpush1.bf16.msra.mxu0 %v898
    %982 = vmatprep.subr.bf16.mxu0 0
    %983 = vmatpush2.bf16.msra.mxu0 0
    %984 = vmatprep.subr.bf16.mxu0 0
    %985 = vmatpush2.bf16.msra.mxu0 0
    %986 = vmatprep.subr.bf16.mxu0 0
    %987 = vmatpush2.bf16.msra.mxu0 0
    %988 = vmatprep.subr.bf16.mxu0 0
    %989 = vmatpush2.bf16.msra.mxu0 0
    %990 = vmatprep.subr.bf16.mxu0 0
    %991 = vmatpush2.bf16.msra.mxu0 0
    %992 = vmatprep.subr.bf16.mxu0 0
    %993 = vmatpush2.bf16.msra.mxu0 0
    %994 = vmatprep.subr.bf16.mxu0 0
    %995 = vmatpush2.bf16.msra.mxu0 0
    %996 = vmatprep.subr.bf16.mxu0 0
    %997 = vmatpush2.bf16.msra.mxu0 0
    %998 = vmatprep.mubr.bf16.mxu0 0
    %999 = vmatmul.mubr.bf16.gmra.mxu0 %v964
    %v1000 = vpop.f32.mrf.mxu0
    %v1001 = vadd.f32 %v725, %v1000
    %v1002 = vpop.f32.mrf.mxu0
    %v1003 = vadd.f32 %v729, %v1002
    %v1004 = vpop.f32.mrf.mxu0
    %v1005 = vpop.f32.mrf.mxu0
    %1006 = vdwg.mxu0
    %1007 = vmatprep.subr.bf16.mxu0 0
    %1008 = vmatpush1.bf16.msra.mxu0 0
    %1009 = vmatprep.subr.bf16.mxu0 0
    %1010 = vmatpush1.bf16.msra.mxu0 0
    %1011 = vmatprep.subr.bf16.mxu0 0
    %1012 = vmatpush1.bf16.msra.mxu0 0
    %1013 = vmatprep.subr.bf16.mxu0 0
    %1014 = vmatpush1.bf16.msra.mxu0 0
    %1015 = vmatprep.subr.bf16.mxu0 0
    %1016 = vmatpush1.bf16.msra.mxu0 0
    %1017 = vmatprep.subr.bf16.mxu0 0
    %1018 = vmatpush1.bf16.msra.mxu0 0
    %1019 = vmatprep.subr.bf16.mxu0 %v917
    %1020 = vmatpush1.bf16.msra.mxu0 %v916
    %1021 = vmatprep.subr.bf16.mxu0 %v901
    %1022 = vmatpush1.bf16.msra.mxu0 %v900
    %1023 = vmatprep.subr.bf16.mxu0 0
    %1024 = vmatpush2.bf16.msra.mxu0 0
    %1025 = vmatprep.subr.bf16.mxu0 0
    %1026 = vmatpush2.bf16.msra.mxu0 0
    %1027 = vmatprep.subr.bf16.mxu0 0
    %1028 = vmatpush2.bf16.msra.mxu0 0
    %1029 = vmatprep.subr.bf16.mxu0 0
    %1030 = vmatpush2.bf16.msra.mxu0 0
    %1031 = vmatprep.subr.bf16.mxu0 0
    %1032 = vmatpush2.bf16.msra.mxu0 0
    %1033 = vmatprep.subr.bf16.mxu0 0
    %1034 = vmatpush2.bf16.msra.mxu0 0
    %1035 = vmatprep.subr.bf16.mxu0 0
    %1036 = vmatpush2.bf16.msra.mxu0 0
    %1037 = vmatprep.subr.bf16.mxu0 0
    %1038 = vmatpush2.bf16.msra.mxu0 0
    %1039 = vmatprep.mubr.bf16.mxu0 0
    %1040 = vmatmul.mubr.bf16.gmra.mxu0 %v964
    %v1041 = vpop.f32.mrf.mxu0
    %v1042 = vadd.f32 %v733, %v1041
    %v1043 = vpop.f32.mrf.mxu0
    %v1044 = vadd.f32 %v737, %v1043
    %v1045 = vpop.f32.mrf.mxu0
    %v1046 = vpop.f32.mrf.mxu0
    %1047 = vdwg.mxu0
    %1048 = vmatprep.subr.bf16.mxu0 0
    %1049 = vmatpush1.bf16.msra.mxu0 0
    %1050 = vmatprep.subr.bf16.mxu0 0
    %1051 = vmatpush1.bf16.msra.mxu0 0
    %1052 = vmatprep.subr.bf16.mxu0 0
    %1053 = vmatpush1.bf16.msra.mxu0 0
    %1054 = vmatprep.subr.bf16.mxu0 0
    %1055 = vmatpush1.bf16.msra.mxu0 0
    %1056 = vmatprep.subr.bf16.mxu0 0
    %1057 = vmatpush1.bf16.msra.mxu0 0
    %1058 = vmatprep.subr.bf16.mxu0 0
    %1059 = vmatpush1.bf16.msra.mxu0 0
    %1060 = vmatprep.subr.bf16.mxu0 %v919
    %1061 = vmatpush1.bf16.msra.mxu0 %v918
    %1062 = vmatprep.subr.bf16.mxu0 %v903
    %1063 = vmatpush1.bf16.msra.mxu0 %v902
    %1064 = vmatprep.subr.bf16.mxu0 0
    %1065 = vmatpush2.bf16.msra.mxu0 0
    %1066 = vmatprep.subr.bf16.mxu0 0
    %1067 = vmatpush2.bf16.msra.mxu0 0
    %1068 = vmatprep.subr.bf16.mxu0 0
    %1069 = vmatpush2.bf16.msra.mxu0 0
    %1070 = vmatprep.subr.bf16.mxu0 0
    %1071 = vmatpush2.bf16.msra.mxu0 0
    %1072 = vmatprep.subr.bf16.mxu0 0
    %1073 = vmatpush2.bf16.msra.mxu0 0
    %1074 = vmatprep.subr.bf16.mxu0 0
    %1075 = vmatpush2.bf16.msra.mxu0 0
    %1076 = vmatprep.subr.bf16.mxu0 0
    %1077 = vmatpush2.bf16.msra.mxu0 0
    %1078 = vmatprep.subr.bf16.mxu0 0
    %1079 = vmatpush2.bf16.msra.mxu0 0
    %1080 = vmatprep.mubr.bf16.mxu0 0
    %1081 = vmatmul.mubr.bf16.gmra.mxu0 %v964
    %v1082 = vpop.f32.mrf.mxu0
    %v1083 = vadd.f32 %v741, %v1082
    %v1084 = vpop.f32.mrf.mxu0
    %v1085 = vadd.f32 %v745, %v1084
    %v1086 = vpop.f32.mrf.mxu0
    %v1087 = vpop.f32.mrf.mxu0
    %1088 = vdwg.mxu0
    %1089 = vmatprep.subr.bf16.mxu0 0
    %1090 = vmatpush1.bf16.msra.mxu0 0
    %1091 = vmatprep.subr.bf16.mxu0 0
    %1092 = vmatpush1.bf16.msra.mxu0 0
    %1093 = vmatprep.subr.bf16.mxu0 0
    %1094 = vmatpush1.bf16.msra.mxu0 0
    %1095 = vmatprep.subr.bf16.mxu0 0
    %1096 = vmatpush1.bf16.msra.mxu0 0
    %1097 = vmatprep.subr.bf16.mxu0 0
    %1098 = vmatpush1.bf16.msra.mxu0 0
    %1099 = vmatprep.subr.bf16.mxu0 0
    %1100 = vmatpush1.bf16.msra.mxu0 0
    %1101 = vmatprep.subr.bf16.mxu0 %v921
    %1102 = vmatpush1.bf16.msra.mxu0 %v920
    %1103 = vmatprep.subr.bf16.mxu0 %v905
    %1104 = vmatpush1.bf16.msra.mxu0 %v904
    %1105 = vmatprep.subr.bf16.mxu0 0
    %1106 = vmatpush2.bf16.msra.mxu0 0
    %1107 = vmatprep.subr.bf16.mxu0 0
    %1108 = vmatpush2.bf16.msra.mxu0 0
    %1109 = vmatprep.subr.bf16.mxu0 0
    %1110 = vmatpush2.bf16.msra.mxu0 0
    %1111 = vmatprep.subr.bf16.mxu0 0
    %1112 = vmatpush2.bf16.msra.mxu0 0
    %1113 = vmatprep.subr.bf16.mxu0 0
    %1114 = vmatpush2.bf16.msra.mxu0 0
    %1115 = vmatprep.subr.bf16.mxu0 0
    %1116 = vmatpush2.bf16.msra.mxu0 0
    %1117 = vmatprep.subr.bf16.mxu0 0
    %1118 = vmatpush2.bf16.msra.mxu0 0
    %1119 = vmatprep.subr.bf16.mxu0 0
    %1120 = vmatpush2.bf16.msra.mxu0 0
    %1121 = vmatprep.mubr.bf16.mxu0 0
    %1122 = vmatmul.mubr.bf16.gmra.mxu0 %v964
    %v1123 = vpop.f32.mrf.mxu0
    %v1124 = vadd.f32 %v749, %v1123
    %v1125 = vpop.f32.mrf.mxu0
    %v1126 = vadd.f32 %v753, %v1125
    %v1127 = vpop.f32.mrf.mxu0
    %v1128 = vpop.f32.mrf.mxu0
    %1129 = vdwg.mxu0
    %1130 = vmatprep.subr.bf16.mxu0 0
    %1131 = vmatpush1.bf16.msra.mxu0 0
    %1132 = vmatprep.subr.bf16.mxu0 0
    %1133 = vmatpush1.bf16.msra.mxu0 0
    %1134 = vmatprep.subr.bf16.mxu0 0
    %1135 = vmatpush1.bf16.msra.mxu0 0
    %1136 = vmatprep.subr.bf16.mxu0 0
    %1137 = vmatpush1.bf16.msra.mxu0 0
    %1138 = vmatprep.subr.bf16.mxu0 0
    %1139 = vmatpush1.bf16.msra.mxu0 0
    %1140 = vmatprep.subr.bf16.mxu0 0
    %1141 = vmatpush1.bf16.msra.mxu0 0
    %1142 = vmatprep.subr.bf16.mxu0 %v923
    %1143 = vmatpush1.bf16.msra.mxu0 %v922
    %1144 = vmatprep.subr.bf16.mxu0 %v907
    %1145 = vmatpush1.bf16.msra.mxu0 %v906
    %1146 = vmatprep.subr.bf16.mxu0 0
    %1147 = vmatpush2.bf16.msra.mxu0 0
    %1148 = vmatprep.subr.bf16.mxu0 0
    %1149 = vmatpush2.bf16.msra.mxu0 0
    %1150 = vmatprep.subr.bf16.mxu0 0
    %1151 = vmatpush2.bf16.msra.mxu0 0
    %1152 = vmatprep.subr.bf16.mxu0 0
    %1153 = vmatpush2.bf16.msra.mxu0 0
    %1154 = vmatprep.subr.bf16.mxu0 0
    %1155 = vmatpush2.bf16.msra.mxu0 0
    %1156 = vmatprep.subr.bf16.mxu0 0
    %1157 = vmatpush2.bf16.msra.mxu0 0
    %1158 = vmatprep.subr.bf16.mxu0 0
    %1159 = vmatpush2.bf16.msra.mxu0 0
    %1160 = vmatprep.subr.bf16.mxu0 0
    %1161 = vmatpush2.bf16.msra.mxu0 0
    %1162 = vmatprep.mubr.bf16.mxu0 0
    %1163 = vmatmul.mubr.bf16.gmra.mxu0 %v964
    %v1164 = vpop.f32.mrf.mxu0
    %v1165 = vadd.f32 %v757, %v1164
    %v1166 = vpop.f32.mrf.mxu0
    %v1167 = vadd.f32 %v761, %v1166
    %v1168 = vpop.f32.mrf.mxu0
    %v1169 = vpop.f32.mrf.mxu0
    %1170 = vdwg.mxu0
    %1171 = vmatprep.subr.bf16.mxu0 0
    %1172 = vmatpush1.bf16.msra.mxu0 0
    %1173 = vmatprep.subr.bf16.mxu0 0
    %1174 = vmatpush1.bf16.msra.mxu0 0
    %1175 = vmatprep.subr.bf16.mxu0 0
    %1176 = vmatpush1.bf16.msra.mxu0 0
    %1177 = vmatprep.subr.bf16.mxu0 0
    %1178 = vmatpush1.bf16.msra.mxu0 0
    %1179 = vmatprep.subr.bf16.mxu0 0
    %1180 = vmatpush1.bf16.msra.mxu0 0
    %1181 = vmatprep.subr.bf16.mxu0 0
    %1182 = vmatpush1.bf16.msra.mxu0 0
    %1183 = vmatprep.subr.bf16.mxu0 %v925
    %1184 = vmatpush1.bf16.msra.mxu0 %v924
    %1185 = vmatprep.subr.bf16.mxu0 %v909
    %1186 = vmatpush1.bf16.msra.mxu0 %v908
    %1187 = vmatprep.subr.bf16.mxu0 0
    %1188 = vmatpush2.bf16.msra.mxu0 0
    %1189 = vmatprep.subr.bf16.mxu0 0
    %1190 = vmatpush2.bf16.msra.mxu0 0
    %1191 = vmatprep.subr.bf16.mxu0 0
    %1192 = vmatpush2.bf16.msra.mxu0 0
    %1193 = vmatprep.subr.bf16.mxu0 0
    %1194 = vmatpush2.bf16.msra.mxu0 0
    %1195 = vmatprep.subr.bf16.mxu0 0
    %1196 = vmatpush2.bf16.msra.mxu0 0
    %1197 = vmatprep.subr.bf16.mxu0 0
    %1198 = vmatpush2.bf16.msra.mxu0 0
    %1199 = vmatprep.subr.bf16.mxu0 0
    %1200 = vmatpush2.bf16.msra.mxu0 0
    %1201 = vmatprep.subr.bf16.mxu0 0
    %1202 = vmatpush2.bf16.msra.mxu0 0
    %1203 = vmatprep.mubr.bf16.mxu0 0
    %1204 = vmatmul.mubr.bf16.gmra.mxu0 %v964
    %v1205 = vpop.f32.mrf.mxu0
    %v1206 = vadd.f32 %v765, %v1205
    %v1207 = vpop.f32.mrf.mxu0
    %v1208 = vadd.f32 %v769, %v1207
    %v1209 = vpop.f32.mrf.mxu0
    %v1210 = vpop.f32.mrf.mxu0
    %1211 = vdwg.mxu0
    %1212 = vmatprep.subr.bf16.mxu0 0
    %1213 = vmatpush1.bf16.msra.mxu0 0
    %1214 = vmatprep.subr.bf16.mxu0 0
    %1215 = vmatpush1.bf16.msra.mxu0 0
    %1216 = vmatprep.subr.bf16.mxu0 0
    %1217 = vmatpush1.bf16.msra.mxu0 0
    %1218 = vmatprep.subr.bf16.mxu0 0
    %1219 = vmatpush1.bf16.msra.mxu0 0
    %1220 = vmatprep.subr.bf16.mxu0 0
    %1221 = vmatpush1.bf16.msra.mxu0 0
    %1222 = vmatprep.subr.bf16.mxu0 0
    %1223 = vmatpush1.bf16.msra.mxu0 0
    %1224 = vmatprep.subr.bf16.mxu0 %v927
    %1225 = vmatpush1.bf16.msra.mxu0 %v926
    %1226 = vmatprep.subr.bf16.mxu0 %v911
    %1227 = vmatpush1.bf16.msra.mxu0 %v910
    %1228 = vmatprep.subr.bf16.mxu0 0
    %1229 = vmatpush2.bf16.msra.mxu0 0
    %1230 = vmatprep.subr.bf16.mxu0 0
    %1231 = vmatpush2.bf16.msra.mxu0 0
    %1232 = vmatprep.subr.bf16.mxu0 0
    %1233 = vmatpush2.bf16.msra.mxu0 0
    %1234 = vmatprep.subr.bf16.mxu0 0
    %1235 = vmatpush2.bf16.msra.mxu0 0
    %1236 = vmatprep.subr.bf16.mxu0 0
    %1237 = vmatpush2.bf16.msra.mxu0 0
    %1238 = vmatprep.subr.bf16.mxu0 0
    %1239 = vmatpush2.bf16.msra.mxu0 0
    %1240 = vmatprep.subr.bf16.mxu0 0
    %1241 = vmatpush2.bf16.msra.mxu0 0
    %1242 = vmatprep.subr.bf16.mxu0 0
    %1243 = vmatpush2.bf16.msra.mxu0 0
    %1244 = vmatprep.mubr.bf16.mxu0 0
    %1245 = vmatmul.mubr.bf16.gmra.mxu0 %v964
    %v1246 = vpop.f32.mrf.mxu0
    %v1247 = vadd.f32 %v773, %v1246
    %v1248 = vpop.f32.mrf.mxu0
    %v1249 = vadd.f32 %v777, %v1248
    %v1250 = vpop.f32.mrf.mxu0
    %v1251 = vpop.f32.mrf.mxu0
    %1252 = vdwg.mxu0
    %1253 = vmatprep.subr.bf16.mxu0 0
    %1254 = vmatpush1.bf16.msra.mxu0 0
    %1255 = vmatprep.subr.bf16.mxu0 0
    %1256 = vmatpush1.bf16.msra.mxu0 0
    %1257 = vmatprep.subr.bf16.mxu0 0
    %1258 = vmatpush1.bf16.msra.mxu0 0
    %1259 = vmatprep.subr.bf16.mxu0 0
    %1260 = vmatpush1.bf16.msra.mxu0 0
    %1261 = vmatprep.subr.bf16.mxu0 0
    %1262 = vmatpush1.bf16.msra.mxu0 0
    %1263 = vmatprep.subr.bf16.mxu0 0
    %1264 = vmatpush1.bf16.msra.mxu0 0
    %1265 = vmatprep.subr.bf16.mxu0 %v929
    %1266 = vmatpush1.bf16.msra.mxu0 %v928
    %1267 = vmatprep.subr.bf16.mxu0 %v913
    %1268 = vmatpush1.bf16.msra.mxu0 %v912
    %1269 = vmatprep.subr.bf16.mxu0 0
    %1270 = vmatpush2.bf16.msra.mxu0 0
    %1271 = vmatprep.subr.bf16.mxu0 0
    %1272 = vmatpush2.bf16.msra.mxu0 0
    %1273 = vmatprep.subr.bf16.mxu0 0
    %1274 = vmatpush2.bf16.msra.mxu0 0
    %1275 = vmatprep.subr.bf16.mxu0 0
    %1276 = vmatpush2.bf16.msra.mxu0 0
    %1277 = vmatprep.subr.bf16.mxu0 0
    %1278 = vmatpush2.bf16.msra.mxu0 0
    %1279 = vmatprep.subr.bf16.mxu0 0
    %1280 = vmatpush2.bf16.msra.mxu0 0
    %1281 = vmatprep.subr.bf16.mxu0 0
    %1282 = vmatpush2.bf16.msra.mxu0 0
    %1283 = vmatprep.subr.bf16.mxu0 0
    %1284 = vmatpush2.bf16.msra.mxu0 0
    %1285 = vmatprep.mubr.bf16.mxu0 0
    %1286 = vmatmul.mubr.bf16.gmra.mxu0 %v964
    %v1287 = vpop.f32.mrf.mxu0
    %v1288 = vadd.f32 %v781, %v1287
    %v1289 = vpop.f32.mrf.mxu0
    %v1290 = vadd.f32 %v785, %v1289
    %v1291 = vpop.f32.mrf.mxu0
    %v1292 = vpop.f32.mrf.mxu0
    %1293 = vdwg.mxu0
    %vm1294 = vcmask 1041408
    %v1295 = vsel %vm1294, %v1001, 0.0
    %v1296 = vrot.slane %v1295, 4
    %v1297 = vadd.f32 %v1295, %v1296
    %v1298 = vrot.slane %v1297, 2
    %v1299 = vadd.f32 %v1297, %v1298
    %v1300 = vrot.slane %v1299, 1
    %v1301 = vadd.f32 %v1299, %v1300
    %v1302 = vsel %vm1294, %v1003, 0.0
    %v1303 = vrot.slane %v1302, 4
    %v1304 = vadd.f32 %v1302, %v1303
    %v1305 = vrot.slane %v1304, 2
    %v1306 = vadd.f32 %v1304, %v1305
    %v1307 = vrot.slane %v1306, 1
    %v1308 = vadd.f32 %v1306, %v1307
    %v1309 = vsel %vm1294, %v1042, 0.0
    %v1310 = vrot.slane %v1309, 4
    %v1311 = vadd.f32 %v1309, %v1310
    %v1312 = vrot.slane %v1311, 2
    %v1313 = vadd.f32 %v1311, %v1312
    %v1314 = vrot.slane %v1313, 1
    %v1315 = vadd.f32 %v1313, %v1314
    %v1316 = vsel %vm1294, %v1044, 0.0
    %v1317 = vrot.slane %v1316, 4
    %v1318 = vadd.f32 %v1316, %v1317
    %v1319 = vrot.slane %v1318, 2
    %v1320 = vadd.f32 %v1318, %v1319
    %v1321 = vrot.slane %v1320, 1
    %v1322 = vadd.f32 %v1320, %v1321
    %v1323 = vsel %vm1294, %v1083, 0.0
    %v1324 = vrot.slane %v1323, 4
    %v1325 = vadd.f32 %v1323, %v1324
    %v1326 = vrot.slane %v1325, 2
    %v1327 = vadd.f32 %v1325, %v1326
    %v1328 = vrot.slane %v1327, 1
    %v1329 = vadd.f32 %v1327, %v1328
    %v1330 = vsel %vm1294, %v1085, 0.0
    %v1331 = vrot.slane %v1330, 4
    %v1332 = vadd.f32 %v1330, %v1331
    %v1333 = vrot.slane %v1332, 2
    %v1334 = vadd.f32 %v1332, %v1333
    %v1335 = vrot.slane %v1334, 1
    %v1336 = vadd.f32 %v1334, %v1335
    %v1337 = vsel %vm1294, %v1124, 0.0
    %v1338 = vrot.slane %v1337, 4
    %v1339 = vadd.f32 %v1337, %v1338
    %v1340 = vrot.slane %v1339, 2
    %v1341 = vadd.f32 %v1339, %v1340
    %v1342 = vrot.slane %v1341, 1
    %v1343 = vadd.f32 %v1341, %v1342
    %v1344 = vsel %vm1294, %v1126, 0.0
    %v1345 = vrot.slane %v1344, 4
    %v1346 = vadd.f32 %v1344, %v1345
    %v1347 = vrot.slane %v1346, 2
    %v1348 = vadd.f32 %v1346, %v1347
    %v1349 = vrot.slane %v1348, 1
    %v1350 = vadd.f32 %v1348, %v1349
    %v1351 = vsel %vm1294, %v1165, 0.0
    %v1352 = vrot.slane %v1351, 4
    %v1353 = vadd.f32 %v1351, %v1352
    %v1354 = vrot.slane %v1353, 2
    %v1355 = vadd.f32 %v1353, %v1354
    %v1356 = vrot.slane %v1355, 1
    %v1357 = vadd.f32 %v1355, %v1356
    %v1358 = vsel %vm1294, %v1167, 0.0
    %v1359 = vrot.slane %v1358, 4
    %v1360 = vadd.f32 %v1358, %v1359
    %v1361 = vrot.slane %v1360, 2
    %v1362 = vadd.f32 %v1360, %v1361
    %v1363 = vrot.slane %v1362, 1
    %v1364 = vadd.f32 %v1362, %v1363
    %v1365 = vsel %vm1294, %v1206, 0.0
    %v1366 = vrot.slane %v1365, 4
    %v1367 = vadd.f32 %v1365, %v1366
    %v1368 = vrot.slane %v1367, 2
    %v1369 = vadd.f32 %v1367, %v1368
    %v1370 = vrot.slane %v1369, 1
    %v1371 = vadd.f32 %v1369, %v1370
    %v1372 = vsel %vm1294, %v1208, 0.0
    %v1373 = vrot.slane %v1372, 4
    %v1374 = vadd.f32 %v1372, %v1373
    %v1375 = vrot.slane %v1374, 2
    %v1376 = vadd.f32 %v1374, %v1375
    %v1377 = vrot.slane %v1376, 1
    %v1378 = vadd.f32 %v1376, %v1377
    %v1379 = vsel %vm1294, %v1247, 0.0
    %v1380 = vrot.slane %v1379, 4
    %v1381 = vadd.f32 %v1379, %v1380
    %v1382 = vrot.slane %v1381, 2
    %v1383 = vadd.f32 %v1381, %v1382
    %v1384 = vrot.slane %v1383, 1
    %v1385 = vadd.f32 %v1383, %v1384
    %v1386 = vsel %vm1294, %v1249, 0.0
    %v1387 = vrot.slane %v1386, 4
    %v1388 = vadd.f32 %v1386, %v1387
    %v1389 = vrot.slane %v1388, 2
    %v1390 = vadd.f32 %v1388, %v1389
    %v1391 = vrot.slane %v1390, 1
    %v1392 = vadd.f32 %v1390, %v1391
    %v1393 = vsel %vm1294, %v1288, 0.0
    %v1394 = vrot.slane %v1393, 4
    %v1395 = vadd.f32 %v1393, %v1394
    %v1396 = vrot.slane %v1395, 2
    %v1397 = vadd.f32 %v1395, %v1396
    %v1398 = vrot.slane %v1397, 1
    %v1399 = vadd.f32 %v1397, %v1398
    %v1400 = vsel %vm1294, %v1290, 0.0
    %v1401 = vrot.slane %v1400, 4
    %v1402 = vadd.f32 %v1400, %v1401
    %v1403 = vrot.slane %v1402, 2
    %v1404 = vadd.f32 %v1402, %v1403
    %v1405 = vrot.slane %v1404, 1
    %v1406 = vadd.f32 %v1404, %v1405
    %v1407 = vrcp.pop 2.0
    %v1408 = vmul.f32 %v1301, %v1407
    %v1409 = vmul.f32 %v1308, %v1407
    %v1410 = vmul.f32 %v1315, %v1407
    %v1411 = vmul.f32 %v1322, %v1407
    %v1412 = vmul.f32 %v1329, %v1407
    %v1413 = vmul.f32 %v1336, %v1407
    %v1414 = vmul.f32 %v1343, %v1407
    %v1415 = vmul.f32 %v1350, %v1407
    %v1416 = vmul.f32 %v1357, %v1407
    %v1417 = vmul.f32 %v1364, %v1407
    %v1418 = vmul.f32 %v1371, %v1407
    %v1419 = vmul.f32 %v1378, %v1407
    %v1420 = vmul.f32 %v1385, %v1407
    %v1421 = vmul.f32 %v1392, %v1407
    %v1422 = vmul.f32 %v1399, %v1407
    %v1423 = vmul.f32 %v1406, %v1407
    %v1424 = vsub.f32 %v1001, %v1408
    %v1425 = vsub.f32 %v1003, %v1409
    %v1426 = vsub.f32 %v1042, %v1410
    %v1427 = vsub.f32 %v1044, %v1411
    %v1428 = vsub.f32 %v1083, %v1412
    %v1429 = vsub.f32 %v1085, %v1413
    %v1430 = vsub.f32 %v1124, %v1414
    %v1431 = vsub.f32 %v1126, %v1415
    %v1432 = vsub.f32 %v1165, %v1416
    %v1433 = vsub.f32 %v1167, %v1417
    %v1434 = vsub.f32 %v1206, %v1418
    %v1435 = vsub.f32 %v1208, %v1419
    %v1436 = vsub.f32 %v1247, %v1420
    %v1437 = vsub.f32 %v1249, %v1421
    %v1438 = vsub.f32 %v1288, %v1422
    %v1439 = vsub.f32 %v1290, %v1423
    %v1440 = vmul.f32 %v1424, %v1424
    %v1441 = vmul.f32 %v1425, %v1425
    %v1442 = vmul.f32 %v1426, %v1426
    %v1443 = vmul.f32 %v1427, %v1427
    %v1444 = vmul.f32 %v1428, %v1428
    %v1445 = vmul.f32 %v1429, %v1429
    %v1446 = vmul.f32 %v1430, %v1430
    %v1447 = vmul.f32 %v1431, %v1431
    %v1448 = vmul.f32 %v1432, %v1432
    %v1449 = vmul.f32 %v1433, %v1433
    %v1450 = vmul.f32 %v1434, %v1434
    %v1451 = vmul.f32 %v1435, %v1435
    %v1452 = vmul.f32 %v1436, %v1436
    %v1453 = vmul.f32 %v1437, %v1437
    %v1454 = vmul.f32 %v1438, %v1438
    %v1455 = vmul.f32 %v1439, %v1439
    %v1456 = vsel %vm1294, %v1440, 0.0
    %v1457 = vrot.slane %v1456, 4
    %v1458 = vadd.f32 %v1456, %v1457
    %v1459 = vrot.slane %v1458, 2
    %v1460 = vadd.f32 %v1458, %v1459
    %v1461 = vrot.slane %v1460, 1
    %v1462 = vadd.f32 %v1460, %v1461
    %v1463 = vsel %vm1294, %v1441, 0.0
    %v1464 = vrot.slane %v1463, 4
    %v1465 = vadd.f32 %v1463, %v1464
    %v1466 = vrot.slane %v1465, 2
    %v1467 = vadd.f32 %v1465, %v1466
    %v1468 = vrot.slane %v1467, 1
    %v1469 = vadd.f32 %v1467, %v1468
    %v1470 = vsel %vm1294, %v1442, 0.0
    %v1471 = vrot.slane %v1470, 4
    %v1472 = vadd.f32 %v1470, %v1471
    %v1473 = vrot.slane %v1472, 2
    %v1474 = vadd.f32 %v1472, %v1473
    %v1475 = vrot.slane %v1474, 1
    %v1476 = vadd.f32 %v1474, %v1475
    %v1477 = vsel %vm1294, %v1443, 0.0
    %v1478 = vrot.slane %v1477, 4
    %v1479 = vadd.f32 %v1477, %v1478
    %v1480 = vrot.slane %v1479, 2
    %v1481 = vadd.f32 %v1479, %v1480
    %v1482 = vrot.slane %v1481, 1
    %v1483 = vadd.f32 %v1481, %v1482
    %v1484 = vsel %vm1294, %v1444, 0.0
    %v1485 = vrot.slane %v1484, 4
    %v1486 = vadd.f32 %v1484, %v1485
    %v1487 = vrot.slane %v1486, 2
    %v1488 = vadd.f32 %v1486, %v1487
    %v1489 = vrot.slane %v1488, 1
    %v1490 = vadd.f32 %v1488, %v1489
    %v1491 = vsel %vm1294, %v1445, 0.0
    %v1492 = vrot.slane %v1491, 4
    %v1493 = vadd.f32 %v1491, %v1492
    %v1494 = vrot.slane %v1493, 2
    %v1495 = vadd.f32 %v1493, %v1494
    %v1496 = vrot.slane %v1495, 1
    %v1497 = vadd.f32 %v1495, %v1496
    %v1498 = vsel %vm1294, %v1446, 0.0
    %v1499 = vrot.slane %v1498, 4
    %v1500 = vadd.f32 %v1498, %v1499
    %v1501 = vrot.slane %v1500, 2
    %v1502 = vadd.f32 %v1500, %v1501
    %v1503 = vrot.slane %v1502, 1
    %v1504 = vadd.f32 %v1502, %v1503
    %v1505 = vsel %vm1294, %v1447, 0.0
    %v1506 = vrot.slane %v1505, 4
    %v1507 = vadd.f32 %v1505, %v1506
    %v1508 = vrot.slane %v1507, 2
    %v1509 = vadd.f32 %v1507, %v1508
    %v1510 = vrot.slane %v1509, 1
    %v1511 = vadd.f32 %v1509, %v1510
    %v1512 = vsel %vm1294, %v1448, 0.0
    %v1513 = vrot.slane %v1512, 4
    %v1514 = vadd.f32 %v1512, %v1513
    %v1515 = vrot.slane %v1514, 2
    %v1516 = vadd.f32 %v1514, %v1515
    %v1517 = vrot.slane %v1516, 1
    %v1518 = vadd.f32 %v1516, %v1517
    %v1519 = vsel %vm1294, %v1449, 0.0
    %v1520 = vrot.slane %v1519, 4
    %v1521 = vadd.f32 %v1519, %v1520
    %v1522 = vrot.slane %v1521, 2
    %v1523 = vadd.f32 %v1521, %v1522
    %v1524 = vrot.slane %v1523, 1
    %v1525 = vadd.f32 %v1523, %v1524
    %v1526 = vsel %vm1294, %v1450, 0.0
    %v1527 = vrot.slane %v1526, 4
    %v1528 = vadd.f32 %v1526, %v1527
    %v1529 = vrot.slane %v1528, 2
    %v1530 = vadd.f32 %v1528, %v1529
    %v1531 = vrot.slane %v1530, 1
    %v1532 = vadd.f32 %v1530, %v1531
    %v1533 = vsel %vm1294, %v1451, 0.0
    %v1534 = vrot.slane %v1533, 4
    %v1535 = vadd.f32 %v1533, %v1534
    %v1536 = vrot.slane %v1535, 2
    %v1537 = vadd.f32 %v1535, %v1536
    %v1538 = vrot.slane %v1537, 1
    %v1539 = vadd.f32 %v1537, %v1538
    %v1540 = vsel %vm1294, %v1452, 0.0
    %v1541 = vrot.slane %v1540, 4
    %v1542 = vadd.f32 %v1540, %v1541
    %v1543 = vrot.slane %v1542, 2
    %v1544 = vadd.f32 %v1542, %v1543
    %v1545 = vrot.slane %v1544, 1
    %v1546 = vadd.f32 %v1544, %v1545
    %v1547 = vsel %vm1294, %v1453, 0.0
    %v1548 = vrot.slane %v1547, 4
    %v1549 = vadd.f32 %v1547, %v1548
    %v1550 = vrot.slane %v1549, 2
    %v1551 = vadd.f32 %v1549, %v1550
    %v1552 = vrot.slane %v1551, 1
    %v1553 = vadd.f32 %v1551, %v1552
    %v1554 = vsel %vm1294, %v1454, 0.0
    %v1555 = vrot.slane %v1554, 4
    %v1556 = vadd.f32 %v1554, %v1555
    %v1557 = vrot.slane %v1556, 2
    %v1558 = vadd.f32 %v1556, %v1557
    %v1559 = vrot.slane %v1558, 1
    %v1560 = vadd.f32 %v1558, %v1559
    %v1561 = vsel %vm1294, %v1455, 0.0
    %v1562 = vrot.slane %v1561, 4
    %v1563 = vadd.f32 %v1561, %v1562
    %v1564 = vrot.slane %v1563, 2
    %v1565 = vadd.f32 %v1563, %v1564
    %v1566 = vrot.slane %v1565, 1
    %v1567 = vadd.f32 %v1565, %v1566
    %v1568 = vmul.f32 %v1462, %v1407
    %v1569 = vmul.f32 %v1469, %v1407
    %v1570 = vmul.f32 %v1476, %v1407
    %v1571 = vmul.f32 %v1483, %v1407
    %v1572 = vmul.f32 %v1490, %v1407
    %v1573 = vmul.f32 %v1497, %v1407
    %v1574 = vmul.f32 %v1504, %v1407
    %v1575 = vmul.f32 %v1511, %v1407
    %v1576 = vmul.f32 %v1518, %v1407
    %v1577 = vmul.f32 %v1525, %v1407
    %v1578 = vmul.f32 %v1532, %v1407
    %v1579 = vmul.f32 %v1539, %v1407
    %v1580 = vmul.f32 %v1546, %v1407
    %v1581 = vmul.f32 %v1553, %v1407
    %v1582 = vmul.f32 %v1560, %v1407
    %v1583 = vmul.f32 %v1567, %v1407
    %v1584 = vadd.f32 %v1568, 1e-05
    %v1585 = vadd.f32 %v1569, 1e-05
    %v1586 = vadd.f32 %v1570, 1e-05
    %v1587 = vadd.f32 %v1571, 1e-05
    %v1588 = vadd.f32 %v1572, 1e-05
    %v1589 = vadd.f32 %v1573, 1e-05
    %v1590 = vadd.f32 %v1574, 1e-05
    %v1591 = vadd.f32 %v1575, 1e-05
    %v1592 = vadd.f32 %v1576, 1e-05
    %v1593 = vadd.f32 %v1577, 1e-05
    %v1594 = vadd.f32 %v1578, 1e-05
    %v1595 = vadd.f32 %v1579, 1e-05
    %v1596 = vadd.f32 %v1580, 1e-05
    %v1597 = vadd.f32 %v1581, 1e-05
    %v1598 = vadd.f32 %v1582, 1e-05
    %v1599 = vadd.f32 %v1583, 1e-05
    %v1600 = vrsqrt.pop %v1584
    %v1601 = vrsqrt.pop %v1585
    %v1602 = vrsqrt.pop %v1586
    %v1603 = vrsqrt.pop %v1587
    %v1604 = vrsqrt.pop %v1588
    %v1605 = vrsqrt.pop %v1589
    %v1606 = vrsqrt.pop %v1590
    %v1607 = vrsqrt.pop %v1591
    %v1608 = vrsqrt.pop %v1592
    %v1609 = vrsqrt.pop %v1593
    %v1610 = vrsqrt.pop %v1594
    %v1611 = vrsqrt.pop %v1595
    %v1612 = vrsqrt.pop %v1596
    %v1613 = vrsqrt.pop %v1597
    %v1614 = vrsqrt.pop %v1598
    %v1615 = vrsqrt.pop %v1599
    %v1616 = vmul.f32 %v1424, %v1600
    %v1617 = vmul.f32 %v1425, %v1601
    %v1618 = vmul.f32 %v1426, %v1602
    %v1619 = vmul.f32 %v1427, %v1603
    %v1620 = vmul.f32 %v1428, %v1604
    %v1621 = vmul.f32 %v1429, %v1605
    %v1622 = vmul.f32 %v1430, %v1606
    %v1623 = vmul.f32 %v1431, %v1607
    %v1624 = vmul.f32 %v1432, %v1608
    %v1625 = vmul.f32 %v1433, %v1609
    %v1626 = vmul.f32 %v1434, %v1610
    %v1627 = vmul.f32 %v1435, %v1611
    %v1628 = vmul.f32 %v1436, %v1612
    %v1629 = vmul.f32 %v1437, %v1613
    %v1630 = vmul.f32 %v1438, %v1614
    %v1631 = vmul.f32 %v1439, %v1615
    %v1632 = vld [vmem:[%s9] sm:$0xff]
    %v1633 = vld [vmem:[%s9 + $0x8] sm:$0xff]
    %v1636 = vlaneseq
    %v1637 = vshrl.u32 %v1636, 7
    %v1638 = vsub.s32 0, %v1637
    %v1639 = vrot.slane %v1632, %v1638
    %v1640 = vlaneseq
    %v1641 = vshrl.u32 %v1640, 7
    %v1642 = vsub.s32 1, %v1641
    %v1643 = vrot.slane %v1632, %v1642
    %v1644 = vlaneseq
    %v1645 = vshrl.u32 %v1644, 7
    %v1646 = vsub.s32 2, %v1645
    %v1647 = vrot.slane %v1632, %v1646
    %v1648 = vlaneseq
    %v1649 = vshrl.u32 %v1648, 7
    %v1650 = vsub.s32 3, %v1649
    %v1651 = vrot.slane %v1632, %v1650
    %v1652 = vlaneseq
    %v1653 = vshrl.u32 %v1652, 7
    %v1654 = vsub.s32 4, %v1653
    %v1655 = vrot.slane %v1632, %v1654
    %v1656 = vlaneseq
    %v1657 = vshrl.u32 %v1656, 7
    %v1658 = vsub.s32 5, %v1657
    %v1659 = vrot.slane %v1632, %v1658
    %v1660 = vlaneseq
    %v1661 = vshrl.u32 %v1660, 7
    %v1662 = vsub.s32 6, %v1661
    %v1663 = vrot.slane %v1632, %v1662
    %v1664 = vlaneseq
    %v1665 = vshrl.u32 %v1664, 7
    %v1666 = vsub.s32 7, %v1665
    %v1667 = vrot.slane %v1632, %v1666
    %v1668 = vlaneseq
    %v1669 = vshrl.u32 %v1668, 7
    %v1670 = vsub.s32 0, %v1669
    %v1671 = vrot.slane %v1633, %v1670
    %v1672 = vlaneseq
    %v1673 = vshrl.u32 %v1672, 7
    %v1674 = vsub.s32 1, %v1673
    %v1675 = vrot.slane %v1633, %v1674
    %v1676 = vlaneseq
    %v1677 = vshrl.u32 %v1676, 7
    %v1678 = vsub.s32 2, %v1677
    %v1679 = vrot.slane %v1633, %v1678
    %v1680 = vlaneseq
    %v1681 = vshrl.u32 %v1680, 7
    %v1682 = vsub.s32 3, %v1681
    %v1683 = vrot.slane %v1633, %v1682
    %v1684 = vlaneseq
    %v1685 = vshrl.u32 %v1684, 7
    %v1686 = vsub.s32 4, %v1685
    %v1687 = vrot.slane %v1633, %v1686
    %v1688 = vlaneseq
    %v1689 = vshrl.u32 %v1688, 7
    %v1690 = vsub.s32 5, %v1689
    %v1691 = vrot.slane %v1633, %v1690
    %v1692 = vlaneseq
    %v1693 = vshrl.u32 %v1692, 7
    %v1694 = vsub.s32 6, %v1693
    %v1695 = vrot.slane %v1633, %v1694
    %v1696 = vlaneseq
    %v1697 = vshrl.u32 %v1696, 7
    %v1698 = vsub.s32 7, %v1697
    %v1699 = vrot.slane %v1633, %v1698
    %v1716 = vmul.f32 %v1616, %v1639
    %v1717 = vmul.f32 %v1617, %v1643
    %v1718 = vmul.f32 %v1618, %v1647
    %v1719 = vmul.f32 %v1619, %v1651
    %v1720 = vmul.f32 %v1620, %v1655
    %v1721 = vmul.f32 %v1621, %v1659
    %v1722 = vmul.f32 %v1622, %v1663
    %v1723 = vmul.f32 %v1623, %v1667
    %v1724 = vmul.f32 %v1624, %v1671
    %v1725 = vmul.f32 %v1625, %v1675
    %v1726 = vmul.f32 %v1626, %v1679
    %v1727 = vmul.f32 %v1627, %v1683
    %v1728 = vmul.f32 %v1628, %v1687
    %v1729 = vmul.f32 %v1629, %v1691
    %v1730 = vmul.f32 %v1630, %v1695
    %v1731 = vmul.f32 %v1631, %v1699
    %v1732 = vld [vmem:[%s10] sm:$0xff]
    %v1733 = vld [vmem:[%s10 + $0x8] sm:$0xff]
    %v1736 = vlaneseq
    %v1737 = vshrl.u32 %v1736, 7
    %v1738 = vsub.s32 0, %v1737
    %v1739 = vrot.slane %v1732, %v1738
    %v1740 = vlaneseq
    %v1741 = vshrl.u32 %v1740, 7
    %v1742 = vsub.s32 1, %v1741
    %v1743 = vrot.slane %v1732, %v1742
    %v1744 = vlaneseq
    %v1745 = vshrl.u32 %v1744, 7
    %v1746 = vsub.s32 2, %v1745
    %v1747 = vrot.slane %v1732, %v1746
    %v1748 = vlaneseq
    %v1749 = vshrl.u32 %v1748, 7
    %v1750 = vsub.s32 3, %v1749
    %v1751 = vrot.slane %v1732, %v1750
    %v1752 = vlaneseq
    %v1753 = vshrl.u32 %v1752, 7
    %v1754 = vsub.s32 4, %v1753
    %v1755 = vrot.slane %v1732, %v1754
    %v1756 = vlaneseq
    %v1757 = vshrl.u32 %v1756, 7
    %v1758 = vsub.s32 5, %v1757
    %v1759 = vrot.slane %v1732, %v1758
    %v1760 = vlaneseq
    %v1761 = vshrl.u32 %v1760, 7
    %v1762 = vsub.s32 6, %v1761
    %v1763 = vrot.slane %v1732, %v1762
    %v1764 = vlaneseq
    %v1765 = vshrl.u32 %v1764, 7
    %v1766 = vsub.s32 7, %v1765
    %v1767 = vrot.slane %v1732, %v1766
    %v1768 = vlaneseq
    %v1769 = vshrl.u32 %v1768, 7
    %v1770 = vsub.s32 0, %v1769
    %v1771 = vrot.slane %v1733, %v1770
    %v1772 = vlaneseq
    %v1773 = vshrl.u32 %v1772, 7
    %v1774 = vsub.s32 1, %v1773
    %v1775 = vrot.slane %v1733, %v1774
    %v1776 = vlaneseq
    %v1777 = vshrl.u32 %v1776, 7
    %v1778 = vsub.s32 2, %v1777
    %v1779 = vrot.slane %v1733, %v1778
    %v1780 = vlaneseq
    %v1781 = vshrl.u32 %v1780, 7
    %v1782 = vsub.s32 3, %v1781
    %v1783 = vrot.slane %v1733, %v1782
    %v1784 = vlaneseq
    %v1785 = vshrl.u32 %v1784, 7
    %v1786 = vsub.s32 4, %v1785
    %v1787 = vrot.slane %v1733, %v1786
    %v1788 = vlaneseq
    %v1789 = vshrl.u32 %v1788, 7
    %v1790 = vsub.s32 5, %v1789
    %v1791 = vrot.slane %v1733, %v1790
    %v1792 = vlaneseq
    %v1793 = vshrl.u32 %v1792, 7
    %v1794 = vsub.s32 6, %v1793
    %v1795 = vrot.slane %v1733, %v1794
    %v1796 = vlaneseq
    %v1797 = vshrl.u32 %v1796, 7
    %v1798 = vsub.s32 7, %v1797
    %v1799 = vrot.slane %v1733, %v1798
    %v1816 = vadd.f32 %v1716, %v1739
    %v1817 = vadd.f32 %v1717, %v1743
    %v1818 = vadd.f32 %v1718, %v1747
    %v1819 = vadd.f32 %v1719, %v1751
    %v1820 = vadd.f32 %v1720, %v1755
    %v1821 = vadd.f32 %v1721, %v1759
    %v1822 = vadd.f32 %v1722, %v1763
    %v1823 = vadd.f32 %v1723, %v1767
    %v1824 = vadd.f32 %v1724, %v1771
    %v1825 = vadd.f32 %v1725, %v1775
    %v1826 = vadd.f32 %v1726, %v1779
    %v1827 = vadd.f32 %v1727, %v1783
    %v1828 = vadd.f32 %v1728, %v1787
    %v1829 = vadd.f32 %v1729, %v1791
    %v1830 = vadd.f32 %v1730, %v1795
    %v1831 = vadd.f32 %v1731, %v1799
    %v1832 = vmax.f32 %v1816, 0.0
    %v1833 = vmax.f32 %v1817, 0.0
    %v1834 = vmax.f32 %v1818, 0.0
    %v1835 = vmax.f32 %v1819, 0.0
    %v1836 = vmax.f32 %v1820, 0.0
    %v1837 = vmax.f32 %v1821, 0.0
    %v1838 = vmax.f32 %v1822, 0.0
    %v1839 = vmax.f32 %v1823, 0.0
    %v1840 = vmax.f32 %v1824, 0.0
    %v1841 = vmax.f32 %v1825, 0.0
    %v1842 = vmax.f32 %v1826, 0.0
    %v1843 = vmax.f32 %v1827, 0.0
    %v1844 = vmax.f32 %v1828, 0.0
    %v1845 = vmax.f32 %v1829, 0.0
    %v1846 = vmax.f32 %v1830, 0.0
    %v1847 = vmax.f32 %v1831, 0.0
    %v1848 = vpack.c.bf16 %v1832, %v1832
    %v1849 = vpack.c.bf16 %v1833, %v1833
    %v1850 = vpack.c.bf16 %v1834, %v1834
    %v1851 = vpack.c.bf16 %v1835, %v1835
    %v1852 = vpack.c.bf16 %v1836, %v1836
    %v1853 = vpack.c.bf16 %v1837, %v1837
    %v1854 = vpack.c.bf16 %v1838, %v1838
    %v1855 = vpack.c.bf16 %v1839, %v1839
    %v1856 = vpack.c.bf16 %v1840, %v1840
    %v1857 = vpack.c.bf16 %v1841, %v1841
    %v1858 = vpack.c.bf16 %v1842, %v1842
    %v1859 = vpack.c.bf16 %v1843, %v1843
    %v1860 = vpack.c.bf16 %v1844, %v1844
    %v1861 = vpack.c.bf16 %v1845, %v1845
    %v1862 = vpack.c.bf16 %v1846, %v1846
    %v1863 = vpack.c.bf16 %v1847, %v1847
    %v1864 = vld [vmem:[%s11] sm:$0xf]
    %v1865 = vld [vmem:[%s11 + $0x4] sm:$0xf]
    %v1866 = vld [vmem:[%s11 + $0x8] sm:$0xf]
    %v1867 = vld [vmem:[%s11 + $0xc] sm:$0xf]
    %v1868 = vld [vmem:[%s11 + $0x10] sm:$0xf]
    %v1869 = vld [vmem:[%s11 + $0x14] sm:$0xf]
    %v1870 = vld [vmem:[%s11 + $0x18] sm:$0xf]
    %v1871 = vld [vmem:[%s11 + $0x1c] sm:$0xf]
    %v1872 = vld [vmem:[%s11 + $0x20] sm:$0xf]
    %v1873 = vld [vmem:[%s11 + $0x24] sm:$0xf]
    %v1874 = vld [vmem:[%s11 + $0x28] sm:$0xf]
    %v1875 = vld [vmem:[%s11 + $0x2c] sm:$0xf]
    %v1876 = vld [vmem:[%s11 + $0x30] sm:$0xf]
    %v1877 = vld [vmem:[%s11 + $0x34] sm:$0xf]
    %v1878 = vld [vmem:[%s11 + $0x38] sm:$0xf]
    %v1879 = vld [vmem:[%s11 + $0x3c] sm:$0xf]
    %v1880 = vld [vmem:[%s11 + $0x40] sm:$0xf]
    %v1881 = vld [vmem:[%s11 + $0x44] sm:$0xf]
    %v1882 = vld [vmem:[%s11 + $0x48] sm:$0xf]
    %v1883 = vld [vmem:[%s11 + $0x4c] sm:$0xf]
    %v1884 = vld [vmem:[%s11 + $0x50] sm:$0xf]
    %v1885 = vld [vmem:[%s11 + $0x54] sm:$0xf]
    %v1886 = vld [vmem:[%s11 + $0x58] sm:$0xf]
    %v1887 = vld [vmem:[%s11 + $0x5c] sm:$0xf]
    %v1888 = vld [vmem:[%s11 + $0x60] sm:$0xf]
    %v1889 = vld [vmem:[%s11 + $0x64] sm:$0xf]
    %v1890 = vld [vmem:[%s11 + $0x68] sm:$0xf]
    %v1891 = vld [vmem:[%s11 + $0x6c] sm:$0xf]
    %v1892 = vld [vmem:[%s11 + $0x70] sm:$0xf]
    %v1893 = vld [vmem:[%s11 + $0x74] sm:$0xf]
    %v1894 = vld [vmem:[%s11 + $0x78] sm:$0xf]
    %v1895 = vld [vmem:[%s11 + $0x7c] sm:$0xf]
    %v1896 = vld [vmem:[%s11 + $0x80] sm:$0xf]
    %v1897 = vld [vmem:[%s11 + $0x84] sm:$0xf]
    %v1898 = vld [vmem:[%s11 + $0x88] sm:$0xf]
    %v1899 = vld [vmem:[%s11 + $0x8c] sm:$0xf]
    %v1900 = vld [vmem:[%s11 + $0x90] sm:$0xf]
    %v1901 = vld [vmem:[%s11 + $0x94] sm:$0xf]
    %v1902 = vld [vmem:[%s11 + $0x98] sm:$0xf]
    %v1903 = vld [vmem:[%s11 + $0x9c] sm:$0xf]
    %v1904 = vld [vmem:[%s11 + $0xa0] sm:$0xf]
    %v1905 = vld [vmem:[%s11 + $0xa4] sm:$0xf]
    %v1906 = vld [vmem:[%s11 + $0xa8] sm:$0xf]
    %v1907 = vld [vmem:[%s11 + $0xac] sm:$0xf]
    %v1908 = vld [vmem:[%s11 + $0xb0] sm:$0xf]
    %v1909 = vld [vmem:[%s11 + $0xb4] sm:$0xf]
    %v1910 = vld [vmem:[%s11 + $0xb8] sm:$0xf]
    %v1911 = vld [vmem:[%s11 + $0xbc] sm:$0xf]
    %v1912 = vld [vmem:[%s11 + $0xc0] sm:$0xf]
    %v1913 = vld [vmem:[%s11 + $0xc4] sm:$0xf]
    %v1914 = vld [vmem:[%s11 + $0xc8] sm:$0xf]
    %v1915 = vld [vmem:[%s11 + $0xcc] sm:$0xf]
    %v1916 = vld [vmem:[%s11 + $0xd0] sm:$0xf]
    %v1917 = vld [vmem:[%s11 + $0xd4] sm:$0xf]
    %v1918 = vld [vmem:[%s11 + $0xd8] sm:$0xf]
    %v1919 = vld [vmem:[%s11 + $0xdc] sm:$0xf]
    %v1920 = vld [vmem:[%s11 + $0xe0] sm:$0xf]
    %v1921 = vld [vmem:[%s11 + $0xe4] sm:$0xf]
    %v1922 = vld [vmem:[%s11 + $0xe8] sm:$0xf]
    %v1923 = vld [vmem:[%s11 + $0xec] sm:$0xf]
    %v1924 = vld [vmem:[%s11 + $0xf0] sm:$0xf]
    %v1925 = vld [vmem:[%s11 + $0xf4] sm:$0xf]
    %v1926 = vld [vmem:[%s11 + $0xf8] sm:$0xf]
    %v1927 = vld [vmem:[%s11 + $0xfc] sm:$0xf]
    %v1928 = vld [vmem:[%s11 + $0x100] sm:$0xf]
    %v1929 = vld [vmem:[%s11 + $0x104] sm:$0xf]
    %v1930 = vld [vmem:[%s11 + $0x108] sm:$0xf]
    %v1931 = vld [vmem:[%s11 + $0x10c] sm:$0xf]
    %v1932 = vld [vmem:[%s11 + $0x110] sm:$0xf]
    %v1933 = vld [vmem:[%s11 + $0x114] sm:$0xf]
    %v1934 = vld [vmem:[%s11 + $0x118] sm:$0xf]
    %v1935 = vld [vmem:[%s11 + $0x11c] sm:$0xf]
    %v1936 = vld [vmem:[%s11 + $0x120] sm:$0xf]
    %v1937 = vld [vmem:[%s11 + $0x124] sm:$0xf]
    %v1938 = vld [vmem:[%s11 + $0x128] sm:$0xf]
    %v1939 = vld [vmem:[%s11 + $0x12c] sm:$0xf]
    %v1940 = vld [vmem:[%s11 + $0x130] sm:$0xf]
    %v1941 = vld [vmem:[%s11 + $0x134] sm:$0xf]
    %v1942 = vld [vmem:[%s11 + $0x138] sm:$0xf]
    %v1943 = vld [vmem:[%s11 + $0x13c] sm:$0xf]
    %v1944 = vld [vmem:[%s11 + $0x140] sm:$0xf]
    %v1945 = vld [vmem:[%s11 + $0x144] sm:$0xf]
    %v1946 = vld [vmem:[%s11 + $0x148] sm:$0xf]
    %v1947 = vld [vmem:[%s11 + $0x14c] sm:$0xf]
    %v1948 = vld [vmem:[%s11 + $0x150] sm:$0xf]
    %v1949 = vld [vmem:[%s11 + $0x154] sm:$0xf]
    %v1950 = vld [vmem:[%s11 + $0x158] sm:$0xf]
    %v1951 = vld [vmem:[%s11 + $0x15c] sm:$0xf]
    %v1952 = vld [vmem:[%s11 + $0x160] sm:$0xf]
    %v1953 = vld [vmem:[%s11 + $0x164] sm:$0xf]
    %v1954 = vld [vmem:[%s11 + $0x168] sm:$0xf]
    %v1955 = vld [vmem:[%s11 + $0x16c] sm:$0xf]
    %v1956 = vld [vmem:[%s11 + $0x170] sm:$0xf]
    %v1957 = vld [vmem:[%s11 + $0x174] sm:$0xf]
    %v1958 = vld [vmem:[%s11 + $0x178] sm:$0xf]
    %v1959 = vld [vmem:[%s11 + $0x17c] sm:$0xf]
    %v1960 = vld [vmem:[%s11 + $0x180] sm:$0xf]
    %v1961 = vld [vmem:[%s11 + $0x184] sm:$0xf]
    %v1962 = vld [vmem:[%s11 + $0x188] sm:$0xf]
    %v1963 = vld [vmem:[%s11 + $0x18c] sm:$0xf]
    %v1964 = vld [vmem:[%s11 + $0x190] sm:$0xf]
    %v1965 = vld [vmem:[%s11 + $0x194] sm:$0xf]
    %v1966 = vld [vmem:[%s11 + $0x198] sm:$0xf]
    %v1967 = vld [vmem:[%s11 + $0x19c] sm:$0xf]
    %v1968 = vld [vmem:[%s11 + $0x1a0] sm:$0xf]
    %v1969 = vld [vmem:[%s11 + $0x1a4] sm:$0xf]
    %v1970 = vld [vmem:[%s11 + $0x1a8] sm:$0xf]
    %v1971 = vld [vmem:[%s11 + $0x1ac] sm:$0xf]
    %v1972 = vld [vmem:[%s11 + $0x1b0] sm:$0xf]
    %v1973 = vld [vmem:[%s11 + $0x1b4] sm:$0xf]
    %v1974 = vld [vmem:[%s11 + $0x1b8] sm:$0xf]
    %v1975 = vld [vmem:[%s11 + $0x1bc] sm:$0xf]
    %v1976 = vld [vmem:[%s11 + $0x1c0] sm:$0xf]
    %v1977 = vld [vmem:[%s11 + $0x1c4] sm:$0xf]
    %v1978 = vld [vmem:[%s11 + $0x1c8] sm:$0xf]
    %v1979 = vld [vmem:[%s11 + $0x1cc] sm:$0xf]
    %v1980 = vld [vmem:[%s11 + $0x1d0] sm:$0xf]
    %v1981 = vld [vmem:[%s11 + $0x1d4] sm:$0xf]
    %v1982 = vld [vmem:[%s11 + $0x1d8] sm:$0xf]
    %v1983 = vld [vmem:[%s11 + $0x1dc] sm:$0xf]
    %v1984 = vld [vmem:[%s11 + $0x1e0] sm:$0xf]
    %v1985 = vld [vmem:[%s11 + $0x1e4] sm:$0xf]
    %v1986 = vld [vmem:[%s11 + $0x1e8] sm:$0xf]
    %v1987 = vld [vmem:[%s11 + $0x1ec] sm:$0xf]
    %v1988 = vld [vmem:[%s11 + $0x1f0] sm:$0xf]
    %v1989 = vld [vmem:[%s11 + $0x1f4] sm:$0xf]
    %v1990 = vld [vmem:[%s11 + $0x1f8] sm:$0xf]
    %v1991 = vld [vmem:[%s11 + $0x1fc] sm:$0xf]
    %v1992 = vld [vmem:[%s11 + $0x200] sm:$0xf]
    %v1993 = vld [vmem:[%s11 + $0x204] sm:$0xf]
    %v1994 = vld [vmem:[%s11 + $0x208] sm:$0xf]
    %v1995 = vld [vmem:[%s11 + $0x20c] sm:$0xf]
    %v1996 = vld [vmem:[%s11 + $0x210] sm:$0xf]
    %v1997 = vld [vmem:[%s11 + $0x214] sm:$0xf]
    %v1998 = vld [vmem:[%s11 + $0x218] sm:$0xf]
    %v1999 = vld [vmem:[%s11 + $0x21c] sm:$0xf]
    %v2000 = vld [vmem:[%s11 + $0x220] sm:$0xf]
    %v2001 = vld [vmem:[%s11 + $0x224] sm:$0xf]
    %v2002 = vld [vmem:[%s11 + $0x228] sm:$0xf]
    %v2003 = vld [vmem:[%s11 + $0x22c] sm:$0xf]
    %v2004 = vld [vmem:[%s11 + $0x230] sm:$0xf]
    %v2005 = vld [vmem:[%s11 + $0x234] sm:$0xf]
    %v2006 = vld [vmem:[%s11 + $0x238] sm:$0xf]
    %v2007 = vld [vmem:[%s11 + $0x23c] sm:$0xf]
    %v2008 = vld [vmem:[%s11 + $0x240] sm:$0xf]
    %v2009 = vld [vmem:[%s11 + $0x244] sm:$0xf]
    %v2010 = vld [vmem:[%s11 + $0x248] sm:$0xf]
    %v2011 = vld [vmem:[%s11 + $0x24c] sm:$0xf]
    %v2012 = vld [vmem:[%s11 + $0x250] sm:$0xf]
    %v2013 = vld [vmem:[%s11 + $0x254] sm:$0xf]
    %v2014 = vld [vmem:[%s11 + $0x258] sm:$0xf]
    %v2015 = vld [vmem:[%s11 + $0x25c] sm:$0xf]
    %v2016 = vld [vmem:[%s11 + $0x260] sm:$0xf]
    %v2017 = vld [vmem:[%s11 + $0x264] sm:$0xf]
    %v2018 = vld [vmem:[%s11 + $0x268] sm:$0xf]
    %v2019 = vld [vmem:[%s11 + $0x26c] sm:$0xf]
    %v2020 = vld [vmem:[%s11 + $0x270] sm:$0xf]
    %v2021 = vld [vmem:[%s11 + $0x274] sm:$0xf]
    %v2022 = vld [vmem:[%s11 + $0x278] sm:$0xf]
    %v2023 = vld [vmem:[%s11 + $0x27c] sm:$0xf]
    %v2024 = vld [vmem:[%s11 + $0x280] sm:$0xf]
    %v2025 = vld [vmem:[%s11 + $0x284] sm:$0xf]
    %v2026 = vld [vmem:[%s11 + $0x288] sm:$0xf]
    %v2027 = vld [vmem:[%s11 + $0x28c] sm:$0xf]
    %v2028 = vld [vmem:[%s11 + $0x290] sm:$0xf]
    %v2029 = vld [vmem:[%s11 + $0x294] sm:$0xf]
    %v2030 = vld [vmem:[%s11 + $0x298] sm:$0xf]
    %v2031 = vld [vmem:[%s11 + $0x29c] sm:$0xf]
    %v2032 = vld [vmem:[%s11 + $0x2a0] sm:$0xf]
    %v2033 = vld [vmem:[%s11 + $0x2a4] sm:$0xf]
    %v2034 = vld [vmem:[%s11 + $0x2a8] sm:$0xf]
    %v2035 = vld [vmem:[%s11 + $0x2ac] sm:$0xf]
    %v2036 = vld [vmem:[%s11 + $0x2b0] sm:$0xf]
    %v2037 = vld [vmem:[%s11 + $0x2b4] sm:$0xf]
    %v2038 = vld [vmem:[%s11 + $0x2b8] sm:$0xf]
    %v2039 = vld [vmem:[%s11 + $0x2bc] sm:$0xf]
    %v2040 = vld [vmem:[%s11 + $0x2c0] sm:$0xf]
    %v2041 = vld [vmem:[%s11 + $0x2c4] sm:$0xf]
    %v2042 = vld [vmem:[%s11 + $0x2c8] sm:$0xf]
    %v2043 = vld [vmem:[%s11 + $0x2cc] sm:$0xf]
    %v2044 = vld [vmem:[%s11 + $0x2d0] sm:$0xf]
    %v2045 = vld [vmem:[%s11 + $0x2d4] sm:$0xf]
    %v2046 = vld [vmem:[%s11 + $0x2d8] sm:$0xf]
    %v2047 = vld [vmem:[%s11 + $0x2dc] sm:$0xf]
    %v2048 = vld [vmem:[%s11 + $0x2e0] sm:$0xf]
    %v2049 = vld [vmem:[%s11 + $0x2e4] sm:$0xf]
    %v2050 = vld [vmem:[%s11 + $0x2e8] sm:$0xf]
    %v2051 = vld [vmem:[%s11 + $0x2ec] sm:$0xf]
    %v2052 = vld [vmem:[%s11 + $0x2f0] sm:$0xf]
    %v2053 = vld [vmem:[%s11 + $0x2f4] sm:$0xf]
    %v2054 = vld [vmem:[%s11 + $0x2f8] sm:$0xf]
    %v2055 = vld [vmem:[%s11 + $0x2fc] sm:$0xf]
    %v2056 = vld [vmem:[%s11 + $0x300] sm:$0xf]
    %v2057 = vld [vmem:[%s11 + $0x304] sm:$0xf]
    %v2058 = vld [vmem:[%s11 + $0x308] sm:$0xf]
    %v2059 = vld [vmem:[%s11 + $0x30c] sm:$0xf]
    %v2060 = vld [vmem:[%s11 + $0x310] sm:$0xf]
    %v2061 = vld [vmem:[%s11 + $0x314] sm:$0xf]
    %v2062 = vld [vmem:[%s11 + $0x318] sm:$0xf]
    %v2063 = vld [vmem:[%s11 + $0x31c] sm:$0xf]
    %v2064 = vld [vmem:[%s11 + $0x320] sm:$0xf]
    %v2065 = vld [vmem:[%s11 + $0x324] sm:$0xf]
    %v2066 = vld [vmem:[%s11 + $0x328] sm:$0xf]
    %v2067 = vld [vmem:[%s11 + $0x32c] sm:$0xf]
    %v2068 = vld [vmem:[%s11 + $0x330] sm:$0xf]
    %v2069 = vld [vmem:[%s11 + $0x334] sm:$0xf]
    %v2070 = vld [vmem:[%s11 + $0x338] sm:$0xf]
    %v2071 = vld [vmem:[%s11 + $0x33c] sm:$0xf]
    %v2072 = vld [vmem:[%s11 + $0x340] sm:$0xf]
    %v2073 = vld [vmem:[%s11 + $0x344] sm:$0xf]
    %v2074 = vld [vmem:[%s11 + $0x348] sm:$0xf]
    %v2075 = vld [vmem:[%s11 + $0x34c] sm:$0xf]
    %v2076 = vld [vmem:[%s11 + $0x350] sm:$0xf]
    %v2077 = vld [vmem:[%s11 + $0x354] sm:$0xf]
    %v2078 = vld [vmem:[%s11 + $0x358] sm:$0xf]
    %v2079 = vld [vmem:[%s11 + $0x35c] sm:$0xf]
    %v2080 = vld [vmem:[%s11 + $0x360] sm:$0xf]
    %v2081 = vld [vmem:[%s11 + $0x364] sm:$0xf]
    %v2082 = vld [vmem:[%s11 + $0x368] sm:$0xf]
    %v2083 = vld [vmem:[%s11 + $0x36c] sm:$0xf]
    %v2084 = vld [vmem:[%s11 + $0x370] sm:$0xf]
    %v2085 = vld [vmem:[%s11 + $0x374] sm:$0xf]
    %v2086 = vld [vmem:[%s11 + $0x378] sm:$0xf]
    %v2087 = vld [vmem:[%s11 + $0x37c] sm:$0xf]
    %v2088 = vld [vmem:[%s11 + $0x380] sm:$0xf]
    %v2089 = vld [vmem:[%s11 + $0x384] sm:$0xf]
    %v2090 = vld [vmem:[%s11 + $0x388] sm:$0xf]
    %v2091 = vld [vmem:[%s11 + $0x38c] sm:$0xf]
    %v2092 = vld [vmem:[%s11 + $0x390] sm:$0xf]
    %v2093 = vld [vmem:[%s11 + $0x394] sm:$0xf]
    %v2094 = vld [vmem:[%s11 + $0x398] sm:$0xf]
    %v2095 = vld [vmem:[%s11 + $0x39c] sm:$0xf]
    %v2096 = vld [vmem:[%s11 + $0x3a0] sm:$0xf]
    %v2097 = vld [vmem:[%s11 + $0x3a4] sm:$0xf]
    %v2098 = vld [vmem:[%s11 + $0x3a8] sm:$0xf]
    %v2099 = vld [vmem:[%s11 + $0x3ac] sm:$0xf]
    %v2100 = vld [vmem:[%s11 + $0x3b0] sm:$0xf]
    %v2101 = vld [vmem:[%s11 + $0x3b4] sm:$0xf]
    %v2102 = vld [vmem:[%s11 + $0x3b8] sm:$0xf]
    %v2103 = vld [vmem:[%s11 + $0x3bc] sm:$0xf]
    %v2104 = vld [vmem:[%s11 + $0x3c0] sm:$0xf]
    %v2105 = vld [vmem:[%s11 + $0x3c4] sm:$0xf]
    %v2106 = vld [vmem:[%s11 + $0x3c8] sm:$0xf]
    %v2107 = vld [vmem:[%s11 + $0x3cc] sm:$0xf]
    %v2108 = vld [vmem:[%s11 + $0x3d0] sm:$0xf]
    %v2109 = vld [vmem:[%s11 + $0x3d4] sm:$0xf]
    %v2110 = vld [vmem:[%s11 + $0x3d8] sm:$0xf]
    %v2111 = vld [vmem:[%s11 + $0x3dc] sm:$0xf]
    %v2112 = vld [vmem:[%s11 + $0x3e0] sm:$0xf]
    %v2113 = vld [vmem:[%s11 + $0x3e4] sm:$0xf]
    %v2114 = vld [vmem:[%s11 + $0x3e8] sm:$0xf]
    %v2115 = vld [vmem:[%s11 + $0x3ec] sm:$0xf]
    %v2116 = vld [vmem:[%s11 + $0x3f0] sm:$0xf]
    %v2117 = vld [vmem:[%s11 + $0x3f4] sm:$0xf]
    %v2118 = vld [vmem:[%s11 + $0x3f8] sm:$0xf]
    %v2119 = vld [vmem:[%s11 + $0x3fc] sm:$0xf]
    %v2120 = vld [vmem:[%s12] sm:$0x1]
    %v2122 = vlaneseq
    %v2123 = vshrl.u32 %v2122, 7
    %v2124 = vsub.s32 0, %v2123
    %v2125 = vrot.slane %v2120, %v2124
    %v2383 = vunpack.c.l.b16 %v1864
    %v2384 = vunpack.c.l.b16 %v1865
    %v2385 = vunpack.c.l.b16 %v1866
    %v2386 = vunpack.c.l.b16 %v1867
    %v2387 = vunpack.c.l.b16 %v1868
    %v2388 = vunpack.c.l.b16 %v1869
    %v2389 = vunpack.c.l.b16 %v1870
    %v2390 = vunpack.c.l.b16 %v1871
    %v2391 = vunpack.c.l.b16 %v1872
    %v2392 = vunpack.c.l.b16 %v1873
    %v2393 = vunpack.c.l.b16 %v1874
    %v2394 = vunpack.c.l.b16 %v1875
    %v2395 = vunpack.c.l.b16 %v1876
    %v2396 = vunpack.c.l.b16 %v1877
    %v2397 = vunpack.c.l.b16 %v1878
    %v2398 = vunpack.c.l.b16 %v1879
    %v2399 = vunpack.c.l.b16 %v1880
    %v2400 = vunpack.c.l.b16 %v1881
    %v2401 = vunpack.c.l.b16 %v1882
    %v2402 = vunpack.c.l.b16 %v1883
    %v2403 = vunpack.c.l.b16 %v1884
    %v2404 = vunpack.c.l.b16 %v1885
    %v2405 = vunpack.c.l.b16 %v1886
    %v2406 = vunpack.c.l.b16 %v1887
    %v2407 = vunpack.c.l.b16 %v1888
    %v2408 = vunpack.c.l.b16 %v1889
    %v2409 = vunpack.c.l.b16 %v1890
    %v2410 = vunpack.c.l.b16 %v1891
    %v2411 = vunpack.c.l.b16 %v1892
    %v2412 = vunpack.c.l.b16 %v1893
    %v2413 = vunpack.c.l.b16 %v1894
    %v2414 = vunpack.c.l.b16 %v1895
    %v2415 = vunpack.c.l.b16 %v1896
    %v2416 = vunpack.c.l.b16 %v1897
    %v2417 = vunpack.c.l.b16 %v1898
    %v2418 = vunpack.c.l.b16 %v1899
    %v2419 = vunpack.c.l.b16 %v1900
    %v2420 = vunpack.c.l.b16 %v1901
    %v2421 = vunpack.c.l.b16 %v1902
    %v2422 = vunpack.c.l.b16 %v1903
    %v2423 = vunpack.c.l.b16 %v1904
    %v2424 = vunpack.c.l.b16 %v1905
    %v2425 = vunpack.c.l.b16 %v1906
    %v2426 = vunpack.c.l.b16 %v1907
    %v2427 = vunpack.c.l.b16 %v1908
    %v2428 = vunpack.c.l.b16 %v1909
    %v2429 = vunpack.c.l.b16 %v1910
    %v2430 = vunpack.c.l.b16 %v1911
    %v2431 = vunpack.c.l.b16 %v1912
    %v2432 = vunpack.c.l.b16 %v1913
    %v2433 = vunpack.c.l.b16 %v1914
    %v2434 = vunpack.c.l.b16 %v1915
    %v2435 = vunpack.c.l.b16 %v1916
    %v2436 = vunpack.c.l.b16 %v1917
    %v2437 = vunpack.c.l.b16 %v1918
    %v2438 = vunpack.c.l.b16 %v1919
    %v2439 = vunpack.c.l.b16 %v1920
    %v2440 = vunpack.c.l.b16 %v1921
    %v2441 = vunpack.c.l.b16 %v1922
    %v2442 = vunpack.c.l.b16 %v1923
    %v2443 = vunpack.c.l.b16 %v1924
    %v2444 = vunpack.c.l.b16 %v1925
    %v2445 = vunpack.c.l.b16 %v1926
    %v2446 = vunpack.c.l.b16 %v1927
    %v2447 = vunpack.c.l.b16 %v1928
    %v2448 = vunpack.c.l.b16 %v1929
    %v2449 = vunpack.c.l.b16 %v1930
    %v2450 = vunpack.c.l.b16 %v1931
    %v2451 = vunpack.c.l.b16 %v1932
    %v2452 = vunpack.c.l.b16 %v1933
    %v2453 = vunpack.c.l.b16 %v1934
    %v2454 = vunpack.c.l.b16 %v1935
    %v2455 = vunpack.c.l.b16 %v1936
    %v2456 = vunpack.c.l.b16 %v1937
    %v2457 = vunpack.c.l.b16 %v1938
    %v2458 = vunpack.c.l.b16 %v1939
    %v2459 = vunpack.c.l.b16 %v1940
    %v2460 = vunpack.c.l.b16 %v1941
    %v2461 = vunpack.c.l.b16 %v1942
    %v2462 = vunpack.c.l.b16 %v1943
    %v2463 = vunpack.c.l.b16 %v1944
    %v2464 = vunpack.c.l.b16 %v1945
    %v2465 = vunpack.c.l.b16 %v1946
    %v2466 = vunpack.c.l.b16 %v1947
    %v2467 = vunpack.c.l.b16 %v1948
    %v2468 = vunpack.c.l.b16 %v1949
    %v2469 = vunpack.c.l.b16 %v1950
    %v2470 = vunpack.c.l.b16 %v1951
    %v2471 = vunpack.c.l.b16 %v1952
    %v2472 = vunpack.c.l.b16 %v1953
    %v2473 = vunpack.c.l.b16 %v1954
    %v2474 = vunpack.c.l.b16 %v1955
    %v2475 = vunpack.c.l.b16 %v1956
    %v2476 = vunpack.c.l.b16 %v1957
    %v2477 = vunpack.c.l.b16 %v1958
    %v2478 = vunpack.c.l.b16 %v1959
    %v2479 = vunpack.c.l.b16 %v1960
    %v2480 = vunpack.c.l.b16 %v1961
    %v2481 = vunpack.c.l.b16 %v1962
    %v2482 = vunpack.c.l.b16 %v1963
    %v2483 = vunpack.c.l.b16 %v1964
    %v2484 = vunpack.c.l.b16 %v1965
    %v2485 = vunpack.c.l.b16 %v1966
    %v2486 = vunpack.c.l.b16 %v1967
    %v2487 = vunpack.c.l.b16 %v1968
    %v2488 = vunpack.c.l.b16 %v1969
    %v2489 = vunpack.c.l.b16 %v1970
    %v2490 = vunpack.c.l.b16 %v1971
    %v2491 = vunpack.c.l.b16 %v1972
    %v2492 = vunpack.c.l.b16 %v1973
    %v2493 = vunpack.c.l.b16 %v1974
    %v2494 = vunpack.c.l.b16 %v1975
    %v2495 = vunpack.c.l.b16 %v1976
    %v2496 = vunpack.c.l.b16 %v1977
    %v2497 = vunpack.c.l.b16 %v1978
    %v2498 = vunpack.c.l.b16 %v1979
    %v2499 = vunpack.c.l.b16 %v1980
    %v2500 = vunpack.c.l.b16 %v1981
    %v2501 = vunpack.c.l.b16 %v1982
    %v2502 = vunpack.c.l.b16 %v1983
    %v2503 = vunpack.c.l.b16 %v1984
    %v2504 = vunpack.c.l.b16 %v1985
    %v2505 = vunpack.c.l.b16 %v1986
    %v2506 = vunpack.c.l.b16 %v1987
    %v2507 = vunpack.c.l.b16 %v1988
    %v2508 = vunpack.c.l.b16 %v1989
    %v2509 = vunpack.c.l.b16 %v1990
    %v2510 = vunpack.c.l.b16 %v1991
    %v2511 = vunpack.c.l.b16 %v1992
    %v2512 = vunpack.c.l.b16 %v1993
    %v2513 = vunpack.c.l.b16 %v1994
    %v2514 = vunpack.c.l.b16 %v1995
    %v2515 = vunpack.c.l.b16 %v1996
    %v2516 = vunpack.c.l.b16 %v1997
    %v2517 = vunpack.c.l.b16 %v1998
    %v2518 = vunpack.c.l.b16 %v1999
    %v2519 = vunpack.c.l.b16 %v2000
    %v2520 = vunpack.c.l.b16 %v2001
    %v2521 = vunpack.c.l.b16 %v2002
    %v2522 = vunpack.c.l.b16 %v2003
    %v2523 = vunpack.c.l.b16 %v2004
    %v2524 = vunpack.c.l.b16 %v2005
    %v2525 = vunpack.c.l.b16 %v2006
    %v2526 = vunpack.c.l.b16 %v2007
    %v2527 = vunpack.c.l.b16 %v2008
    %v2528 = vunpack.c.l.b16 %v2009
    %v2529 = vunpack.c.l.b16 %v2010
    %v2530 = vunpack.c.l.b16 %v2011
    %v2531 = vunpack.c.l.b16 %v2012
    %v2532 = vunpack.c.l.b16 %v2013
    %v2533 = vunpack.c.l.b16 %v2014
    %v2534 = vunpack.c.l.b16 %v2015
    %v2535 = vunpack.c.l.b16 %v2016
    %v2536 = vunpack.c.l.b16 %v2017
    %v2537 = vunpack.c.l.b16 %v2018
    %v2538 = vunpack.c.l.b16 %v2019
    %v2539 = vunpack.c.l.b16 %v2020
    %v2540 = vunpack.c.l.b16 %v2021
    %v2541 = vunpack.c.l.b16 %v2022
    %v2542 = vunpack.c.l.b16 %v2023
    %v2543 = vunpack.c.l.b16 %v2024
    %v2544 = vunpack.c.l.b16 %v2025
    %v2545 = vunpack.c.l.b16 %v2026
    %v2546 = vunpack.c.l.b16 %v2027
    %v2547 = vunpack.c.l.b16 %v2028
    %v2548 = vunpack.c.l.b16 %v2029
    %v2549 = vunpack.c.l.b16 %v2030
    %v2550 = vunpack.c.l.b16 %v2031
    %v2551 = vunpack.c.l.b16 %v2032
    %v2552 = vunpack.c.l.b16 %v2033
    %v2553 = vunpack.c.l.b16 %v2034
    %v2554 = vunpack.c.l.b16 %v2035
    %v2555 = vunpack.c.l.b16 %v2036
    %v2556 = vunpack.c.l.b16 %v2037
    %v2557 = vunpack.c.l.b16 %v2038
    %v2558 = vunpack.c.l.b16 %v2039
    %v2559 = vunpack.c.l.b16 %v2040
    %v2560 = vunpack.c.l.b16 %v2041
    %v2561 = vunpack.c.l.b16 %v2042
    %v2562 = vunpack.c.l.b16 %v2043
    %v2563 = vunpack.c.l.b16 %v2044
    %v2564 = vunpack.c.l.b16 %v2045
    %v2565 = vunpack.c.l.b16 %v2046
    %v2566 = vunpack.c.l.b16 %v2047
    %v2567 = vunpack.c.l.b16 %v2048
    %v2568 = vunpack.c.l.b16 %v2049
    %v2569 = vunpack.c.l.b16 %v2050
    %v2570 = vunpack.c.l.b16 %v2051
    %v2571 = vunpack.c.l.b16 %v2052
    %v2572 = vunpack.c.l.b16 %v2053
    %v2573 = vunpack.c.l.b16 %v2054
    %v2574 = vunpack.c.l.b16 %v2055
    %v2575 = vunpack.c.l.b16 %v2056
    %v2576 = vunpack.c.l.b16 %v2057
    %v2577 = vunpack.c.l.b16 %v2058
    %v2578 = vunpack.c.l.b16 %v2059
    %v2579 = vunpack.c.l.b16 %v2060
    %v2580 = vunpack.c.l.b16 %v2061
    %v2581 = vunpack.c.l.b16 %v2062
    %v2582 = vunpack.c.l.b16 %v2063
    %v2583 = vunpack.c.l.b16 %v2064
    %v2584 = vunpack.c.l.b16 %v2065
    %v2585 = vunpack.c.l.b16 %v2066
    %v2586 = vunpack.c.l.b16 %v2067
    %v2587 = vunpack.c.l.b16 %v2068
    %v2588 = vunpack.c.l.b16 %v2069
    %v2589 = vunpack.c.l.b16 %v2070
    %v2590 = vunpack.c.l.b16 %v2071
    %v2591 = vunpack.c.l.b16 %v2072
    %v2592 = vunpack.c.l.b16 %v2073
    %v2593 = vunpack.c.l.b16 %v2074
    %v2594 = vunpack.c.l.b16 %v2075
    %v2595 = vunpack.c.l.b16 %v2076
    %v2596 = vunpack.c.l.b16 %v2077
    %v2597 = vunpack.c.l.b16 %v2078
    %v2598 = vunpack.c.l.b16 %v2079
    %v2599 = vunpack.c.l.b16 %v2080
    %v2600 = vunpack.c.l.b16 %v2081
    %v2601 = vunpack.c.l.b16 %v2082
    %v2602 = vunpack.c.l.b16 %v2083
    %v2603 = vunpack.c.l.b16 %v2084
    %v2604 = vunpack.c.l.b16 %v2085
    %v2605 = vunpack.c.l.b16 %v2086
    %v2606 = vunpack.c.l.b16 %v2087
    %v2607 = vunpack.c.l.b16 %v2088
    %v2608 = vunpack.c.l.b16 %v2089
    %v2609 = vunpack.c.l.b16 %v2090
    %v2610 = vunpack.c.l.b16 %v2091
    %v2611 = vunpack.c.l.b16 %v2092
    %v2612 = vunpack.c.l.b16 %v2093
    %v2613 = vunpack.c.l.b16 %v2094
    %v2614 = vunpack.c.l.b16 %v2095
    %v2615 = vunpack.c.l.b16 %v2096
    %v2616 = vunpack.c.l.b16 %v2097
    %v2617 = vunpack.c.l.b16 %v2098
    %v2618 = vunpack.c.l.b16 %v2099
    %v2619 = vunpack.c.l.b16 %v2100
    %v2620 = vunpack.c.l.b16 %v2101
    %v2621 = vunpack.c.l.b16 %v2102
    %v2622 = vunpack.c.l.b16 %v2103
    %v2623 = vunpack.c.l.b16 %v2104
    %v2624 = vunpack.c.l.b16 %v2105
    %v2625 = vunpack.c.l.b16 %v2106
    %v2626 = vunpack.c.l.b16 %v2107
    %v2627 = vunpack.c.l.b16 %v2108
    %v2628 = vunpack.c.l.b16 %v2109
    %v2629 = vunpack.c.l.b16 %v2110
    %v2630 = vunpack.c.l.b16 %v2111
    %v2631 = vunpack.c.l.b16 %v2112
    %v2632 = vunpack.c.l.b16 %v2113
    %v2633 = vunpack.c.l.b16 %v2114
    %v2634 = vunpack.c.l.b16 %v2115
    %v2635 = vunpack.c.l.b16 %v2116
    %v2636 = vunpack.c.l.b16 %v2117
    %v2637 = vunpack.c.l.b16 %v2118
    %v2638 = vunpack.c.l.b16 %v2119
    %v2639 = vpack.c.b16 %v2384, %v2383
    %v2640 = vpack.c.b16 %v2386, %v2385
    %v2641 = vpack.c.b16 %v2388, %v2387
    %v2642 = vpack.c.b16 %v2390, %v2389
    %v2643 = vpack.c.b16 %v2392, %v2391
    %v2644 = vpack.c.b16 %v2394, %v2393
    %v2645 = vpack.c.b16 %v2396, %v2395
    %v2646 = vpack.c.b16 %v2398, %v2397
    %v2647 = vpack.c.b16 %v2400, %v2399
    %v2648 = vpack.c.b16 %v2402, %v2401
    %v2649 = vpack.c.b16 %v2404, %v2403
    %v2650 = vpack.c.b16 %v2406, %v2405
    %v2651 = vpack.c.b16 %v2408, %v2407
    %v2652 = vpack.c.b16 %v2410, %v2409
    %v2653 = vpack.c.b16 %v2412, %v2411
    %v2654 = vpack.c.b16 %v2414, %v2413
    %v2655 = vpack.c.b16 %v2416, %v2415
    %v2656 = vpack.c.b16 %v2418, %v2417
    %v2657 = vpack.c.b16 %v2420, %v2419
    %v2658 = vpack.c.b16 %v2422, %v2421
    %v2659 = vpack.c.b16 %v2424, %v2423
    %v2660 = vpack.c.b16 %v2426, %v2425
    %v2661 = vpack.c.b16 %v2428, %v2427
    %v2662 = vpack.c.b16 %v2430, %v2429
    %v2663 = vpack.c.b16 %v2432, %v2431
    %v2664 = vpack.c.b16 %v2434, %v2433
    %v2665 = vpack.c.b16 %v2436, %v2435
    %v2666 = vpack.c.b16 %v2438, %v2437
    %v2667 = vpack.c.b16 %v2440, %v2439
    %v2668 = vpack.c.b16 %v2442, %v2441
    %v2669 = vpack.c.b16 %v2444, %v2443
    %v2670 = vpack.c.b16 %v2446, %v2445
    %v2671 = vpack.c.b16 %v2448, %v2447
    %v2672 = vpack.c.b16 %v2450, %v2449
    %v2673 = vpack.c.b16 %v2452, %v2451
    %v2674 = vpack.c.b16 %v2454, %v2453
    %v2675 = vpack.c.b16 %v2456, %v2455
    %v2676 = vpack.c.b16 %v2458, %v2457
    %v2677 = vpack.c.b16 %v2460, %v2459
    %v2678 = vpack.c.b16 %v2462, %v2461
    %v2679 = vpack.c.b16 %v2464, %v2463
    %v2680 = vpack.c.b16 %v2466, %v2465
    %v2681 = vpack.c.b16 %v2468, %v2467
    %v2682 = vpack.c.b16 %v2470, %v2469
    %v2683 = vpack.c.b16 %v2472, %v2471
    %v2684 = vpack.c.b16 %v2474, %v2473
    %v2685 = vpack.c.b16 %v2476, %v2475
    %v2686 = vpack.c.b16 %v2478, %v2477
    %v2687 = vpack.c.b16 %v2480, %v2479
    %v2688 = vpack.c.b16 %v2482, %v2481
    %v2689 = vpack.c.b16 %v2484, %v2483
    %v2690 = vpack.c.b16 %v2486, %v2485
    %v2691 = vpack.c.b16 %v2488, %v2487
    %v2692 = vpack.c.b16 %v2490, %v2489
    %v2693 = vpack.c.b16 %v2492, %v2491
    %v2694 = vpack.c.b16 %v2494, %v2493
    %v2695 = vpack.c.b16 %v2496, %v2495
    %v2696 = vpack.c.b16 %v2498, %v2497
    %v2697 = vpack.c.b16 %v2500, %v2499
    %v2698 = vpack.c.b16 %v2502, %v2501
    %v2699 = vpack.c.b16 %v2504, %v2503
    %v2700 = vpack.c.b16 %v2506, %v2505
    %v2701 = vpack.c.b16 %v2508, %v2507
    %v2702 = vpack.c.b16 %v2510, %v2509
    %v2703 = vpack.c.b16 %v2512, %v2511
    %v2704 = vpack.c.b16 %v2514, %v2513
    %v2705 = vpack.c.b16 %v2516, %v2515
    %v2706 = vpack.c.b16 %v2518, %v2517
    %v2707 = vpack.c.b16 %v2520, %v2519
    %v2708 = vpack.c.b16 %v2522, %v2521
    %v2709 = vpack.c.b16 %v2524, %v2523
    %v2710 = vpack.c.b16 %v2526, %v2525
    %v2711 = vpack.c.b16 %v2528, %v2527
    %v2712 = vpack.c.b16 %v2530, %v2529
    %v2713 = vpack.c.b16 %v2532, %v2531
    %v2714 = vpack.c.b16 %v2534, %v2533
    %v2715 = vpack.c.b16 %v2536, %v2535
    %v2716 = vpack.c.b16 %v2538, %v2537
    %v2717 = vpack.c.b16 %v2540, %v2539
    %v2718 = vpack.c.b16 %v2542, %v2541
    %v2719 = vpack.c.b16 %v2544, %v2543
    %v2720 = vpack.c.b16 %v2546, %v2545
    %v2721 = vpack.c.b16 %v2548, %v2547
    %v2722 = vpack.c.b16 %v2550, %v2549
    %v2723 = vpack.c.b16 %v2552, %v2551
    %v2724 = vpack.c.b16 %v2554, %v2553
    %v2725 = vpack.c.b16 %v2556, %v2555
    %v2726 = vpack.c.b16 %v2558, %v2557
    %v2727 = vpack.c.b16 %v2560, %v2559
    %v2728 = vpack.c.b16 %v2562, %v2561
    %v2729 = vpack.c.b16 %v2564, %v2563
    %v2730 = vpack.c.b16 %v2566, %v2565
    %v2731 = vpack.c.b16 %v2568, %v2567
    %v2732 = vpack.c.b16 %v2570, %v2569
    %v2733 = vpack.c.b16 %v2572, %v2571
    %v2734 = vpack.c.b16 %v2574, %v2573
    %v2735 = vpack.c.b16 %v2576, %v2575
    %v2736 = vpack.c.b16 %v2578, %v2577
    %v2737 = vpack.c.b16 %v2580, %v2579
    %v2738 = vpack.c.b16 %v2582, %v2581
    %v2739 = vpack.c.b16 %v2584, %v2583
    %v2740 = vpack.c.b16 %v2586, %v2585
    %v2741 = vpack.c.b16 %v2588, %v2587
    %v2742 = vpack.c.b16 %v2590, %v2589
    %v2743 = vpack.c.b16 %v2592, %v2591
    %v2744 = vpack.c.b16 %v2594, %v2593
    %v2745 = vpack.c.b16 %v2596, %v2595
    %v2746 = vpack.c.b16 %v2598, %v2597
    %v2747 = vpack.c.b16 %v2600, %v2599
    %v2748 = vpack.c.b16 %v2602, %v2601
    %v2749 = vpack.c.b16 %v2604, %v2603
    %v2750 = vpack.c.b16 %v2606, %v2605
    %v2751 = vpack.c.b16 %v2608, %v2607
    %v2752 = vpack.c.b16 %v2610, %v2609
    %v2753 = vpack.c.b16 %v2612, %v2611
    %v2754 = vpack.c.b16 %v2614, %v2613
    %v2755 = vpack.c.b16 %v2616, %v2615
    %v2756 = vpack.c.b16 %v2618, %v2617
    %v2757 = vpack.c.b16 %v2620, %v2619
    %v2758 = vpack.c.b16 %v2622, %v2621
    %v2759 = vpack.c.b16 %v2624, %v2623
    %v2760 = vpack.c.b16 %v2626, %v2625
    %v2761 = vpack.c.b16 %v2628, %v2627
    %v2762 = vpack.c.b16 %v2630, %v2629
    %v2763 = vpack.c.b16 %v2632, %v2631
    %v2764 = vpack.c.b16 %v2634, %v2633
    %v2765 = vpack.c.b16 %v2636, %v2635
    %v2766 = vpack.c.b16 %v2638, %v2637
    %2895 = vmatprep.subr.bf16.mxu0 0
    %2896 = vmatpush1.bf16.msra.mxu0 %v2646
    %2897 = vmatprep.subr.bf16.mxu0 0
    %2898 = vmatpush1.bf16.msra.mxu0 %v2645
    %2899 = vmatprep.subr.bf16.mxu0 0
    %2900 = vmatpush1.bf16.msra.mxu0 %v2644
    %2901 = vmatprep.subr.bf16.mxu0 0
    %2902 = vmatpush1.bf16.msra.mxu0 %v2643
    %2903 = vmatprep.subr.bf16.mxu0 0
    %2904 = vmatpush1.bf16.msra.mxu0 %v2642
    %2905 = vmatprep.subr.bf16.mxu0 0
    %2906 = vmatpush1.bf16.msra.mxu0 %v2641
    %2907 = vmatprep.subr.bf16.mxu0 0
    %2908 = vmatpush1.bf16.msra.mxu0 %v2640
    %2909 = vmatprep.subr.bf16.mxu0 0
    %2910 = vmatpush1.bf16.msra.mxu0 %v2639
    %2911 = vmatprep.subr.bf16.mxu0 0
    %2912 = vmatpush2.bf16.msra.mxu0 %v2654
    %2913 = vmatprep.subr.bf16.mxu0 0
    %2914 = vmatpush2.bf16.msra.mxu0 %v2653
    %2915 = vmatprep.subr.bf16.mxu0 0
    %2916 = vmatpush2.bf16.msra.mxu0 %v2652
    %2917 = vmatprep.subr.bf16.mxu0 0
    %2918 = vmatpush2.bf16.msra.mxu0 %v2651
    %2919 = vmatprep.subr.bf16.mxu0 0
    %2920 = vmatpush2.bf16.msra.mxu0 %v2650
    %2921 = vmatprep.subr.bf16.mxu0 0
    %2922 = vmatpush2.bf16.msra.mxu0 %v2649
    %2923 = vmatprep.subr.bf16.mxu0 0
    %2924 = vmatpush2.bf16.msra.mxu0 %v2648
    %2925 = vmatprep.subr.bf16.mxu0 0
    %2926 = vmatpush2.bf16.msra.mxu0 %v2647
    %2927 = vmatprep.mubr.bf16.mxu0 %v1849
    %2928 = vmatmul.mubr.bf16.gmra.mxu0 %v1848
    %v2929 = vpop.f32.mrf.mxu0
    %v2930 = vadd.f32 %v2125, %v2929
    %v2931 = vpop.f32.mrf.mxu0
    %v2932 = vpop.f32.mrf.mxu0
    %v2933 = vpop.f32.mrf.mxu0
    %2934 = vdwg.mxu0
    %2935 = vmatprep.subr.bf16.mxu0 0
    %2936 = vmatpush1.bf16.msra.mxu0 %v2662
    %2937 = vmatprep.subr.bf16.mxu0 0
    %2938 = vmatpush1.bf16.msra.mxu0 %v2661
    %2939 = vmatprep.subr.bf16.mxu0 0
    %2940 = vmatpush1.bf16.msra.mxu0 %v2660
    %2941 = vmatprep.subr.bf16.mxu0 0
    %2942 = vmatpush1.bf16.msra.mxu0 %v2659
    %2943 = vmatprep.subr.bf16.mxu0 0
    %2944 = vmatpush1.bf16.msra.mxu0 %v2658
    %2945 = vmatprep.subr.bf16.mxu0 0
    %2946 = vmatpush1.bf16.msra.mxu0 %v2657
    %2947 = vmatprep.subr.bf16.mxu0 0
    %2948 = vmatpush1.bf16.msra.mxu0 %v2656
    %2949 = vmatprep.subr.bf16.mxu0 0
    %2950 = vmatpush1.bf16.msra.mxu0 %v2655
    %2951 = vmatprep.subr.bf16.mxu0 0
    %2952 = vmatpush2.bf16.msra.mxu0 %v2670
    %2953 = vmatprep.subr.bf16.mxu0 0
    %2954 = vmatpush2.bf16.msra.mxu0 %v2669
    %2955 = vmatprep.subr.bf16.mxu0 0
    %2956 = vmatpush2.bf16.msra.mxu0 %v2668
    %2957 = vmatprep.subr.bf16.mxu0 0
    %2958 = vmatpush2.bf16.msra.mxu0 %v2667
    %2959 = vmatprep.subr.bf16.mxu0 0
    %2960 = vmatpush2.bf16.msra.mxu0 %v2666
    %2961 = vmatprep.subr.bf16.mxu0 0
    %2962 = vmatpush2.bf16.msra.mxu0 %v2665
    %2963 = vmatprep.subr.bf16.mxu0 0
    %2964 = vmatpush2.bf16.msra.mxu0 %v2664
    %2965 = vmatprep.subr.bf16.mxu0 0
    %2966 = vmatpush2.bf16.msra.mxu0 %v2663
    %2967 = vmatprep.mubr.bf16.mxu0 %v1851
    %2968 = vmatmul.mubr.bf16.gmra.mxu0 %v1850
    %v2969 = vpop.f32.mrf.mxu0
    %v2970 = vadd.f32 %v2930, %v2969
    %v2971 = vpop.f32.mrf.mxu0
    %v2972 = vpop.f32.mrf.mxu0
    %v2973 = vpop.f32.mrf.mxu0
    %2974 = vdwg.mxu0
    %2975 = vmatprep.subr.bf16.mxu0 0
    %2976 = vmatpush1.bf16.msra.mxu0 %v2678
    %2977 = vmatprep.subr.bf16.mxu0 0
    %2978 = vmatpush1.bf16.msra.mxu0 %v2677
    %2979 = vmatprep.subr.bf16.mxu0 0
    %2980 = vmatpush1.bf16.msra.mxu0 %v2676
    %2981 = vmatprep.subr.bf16.mxu0 0
    %2982 = vmatpush1.bf16.msra.mxu0 %v2675
    %2983 = vmatprep.subr.bf16.mxu0 0
    %2984 = vmatpush1.bf16.msra.mxu0 %v2674
    %2985 = vmatprep.subr.bf16.mxu0 0
    %2986 = vmatpush1.bf16.msra.mxu0 %v2673
    %2987 = vmatprep.subr.bf16.mxu0 0
    %2988 = vmatpush1.bf16.msra.mxu0 %v2672
    %2989 = vmatprep.subr.bf16.mxu0 0
    %2990 = vmatpush1.bf16.msra.mxu0 %v2671
    %2991 = vmatprep.subr.bf16.mxu0 0
    %2992 = vmatpush2.bf16.msra.mxu0 %v2686
    %2993 = vmatprep.subr.bf16.mxu0 0
    %2994 = vmatpush2.bf16.msra.mxu0 %v2685
    %2995 = vmatprep.subr.bf16.mxu0 0
    %2996 = vmatpush2.bf16.msra.mxu0 %v2684
    %2997 = vmatprep.subr.bf16.mxu0 0
    %2998 = vmatpush2.bf16.msra.mxu0 %v2683
    %2999 = vmatprep.subr.bf16.mxu0 0
    %3000 = vmatpush2.bf16.msra.mxu0 %v2682
    %3001 = vmatprep.subr.bf16.mxu0 0
    %3002 = vmatpush2.bf16.msra.mxu0 %v2681
    %3003 = vmatprep.subr.bf16.mxu0 0
    %3004 = vmatpush2.bf16.msra.mxu0 %v2680
    %3005 = vmatprep.subr.bf16.mxu0 0
    %3006 = vmatpush2.bf16.msra.mxu0 %v2679
    %3007 = vmatprep.mubr.bf16.mxu0 %v1853
    %3008 = vmatmul.mubr.bf16.gmra.mxu0 %v1852
    %v3009 = vpop.f32.mrf.mxu0
    %v3010 = vadd.f32 %v2970, %v3009
    %v3011 = vpop.f32.mrf.mxu0
    %v3012 = vpop.f32.mrf.mxu0
    %v3013 = vpop.f32.mrf.mxu0
    %3014 = vdwg.mxu0
    %3015 = vmatprep.subr.bf16.mxu0 0
    %3016 = vmatpush1.bf16.msra.mxu0 %v2694
    %3017 = vmatprep.subr.bf16.mxu0 0
    %3018 = vmatpush1.bf16.msra.mxu0 %v2693
    %3019 = vmatprep.subr.bf16.mxu0 0
    %3020 = vmatpush1.bf16.msra.mxu0 %v2692
    %3021 = vmatprep.subr.bf16.mxu0 0
    %3022 = vmatpush1.bf16.msra.mxu0 %v2691
    %3023 = vmatprep.subr.bf16.mxu0 0
    %3024 = vmatpush1.bf16.msra.mxu0 %v2690
    %3025 = vmatprep.subr.bf16.mxu0 0
    %3026 = vmatpush1.bf16.msra.mxu0 %v2689
    %3027 = vmatprep.subr.bf16.mxu0 0
    %3028 = vmatpush1.bf16.msra.mxu0 %v2688
    %3029 = vmatprep.subr.bf16.mxu0 0
    %3030 = vmatpush1.bf16.msra.mxu0 %v2687
    %3031 = vmatprep.subr.bf16.mxu0 0
    %3032 = vmatpush2.bf16.msra.mxu0 %v2702
    %3033 = vmatprep.subr.bf16.mxu0 0
    %3034 = vmatpush2.bf16.msra.mxu0 %v2701
    %3035 = vmatprep.subr.bf16.mxu0 0
    %3036 = vmatpush2.bf16.msra.mxu0 %v2700
    %3037 = vmatprep.subr.bf16.mxu0 0
    %3038 = vmatpush2.bf16.msra.mxu0 %v2699
    %3039 = vmatprep.subr.bf16.mxu0 0
    %3040 = vmatpush2.bf16.msra.mxu0 %v2698
    %3041 = vmatprep.subr.bf16.mxu0 0
    %3042 = vmatpush2.bf16.msra.mxu0 %v2697
    %3043 = vmatprep.subr.bf16.mxu0 0
    %3044 = vmatpush2.bf16.msra.mxu0 %v2696
    %3045 = vmatprep.subr.bf16.mxu0 0
    %3046 = vmatpush2.bf16.msra.mxu0 %v2695
    %3047 = vmatprep.mubr.bf16.mxu0 %v1855
    %3048 = vmatmul.mubr.bf16.gmra.mxu0 %v1854
    %v3049 = vpop.f32.mrf.mxu0
    %v3050 = vadd.f32 %v3010, %v3049
    %v3051 = vpop.f32.mrf.mxu0
    %v3052 = vpop.f32.mrf.mxu0
    %v3053 = vpop.f32.mrf.mxu0
    %3054 = vdwg.mxu0
    %3055 = vmatprep.subr.bf16.mxu0 0
    %3056 = vmatpush1.bf16.msra.mxu0 %v2710
    %3057 = vmatprep.subr.bf16.mxu0 0
    %3058 = vmatpush1.bf16.msra.mxu0 %v2709
    %3059 = vmatprep.subr.bf16.mxu0 0
    %3060 = vmatpush1.bf16.msra.mxu0 %v2708
    %3061 = vmatprep.subr.bf16.mxu0 0
    %3062 = vmatpush1.bf16.msra.mxu0 %v2707
    %3063 = vmatprep.subr.bf16.mxu0 0
    %3064 = vmatpush1.bf16.msra.mxu0 %v2706
    %3065 = vmatprep.subr.bf16.mxu0 0
    %3066 = vmatpush1.bf16.msra.mxu0 %v2705
    %3067 = vmatprep.subr.bf16.mxu0 0
    %3068 = vmatpush1.bf16.msra.mxu0 %v2704
    %3069 = vmatprep.subr.bf16.mxu0 0
    %3070 = vmatpush1.bf16.msra.mxu0 %v2703
    %3071 = vmatprep.subr.bf16.mxu0 0
    %3072 = vmatpush2.bf16.msra.mxu0 %v2718
    %3073 = vmatprep.subr.bf16.mxu0 0
    %3074 = vmatpush2.bf16.msra.mxu0 %v2717
    %3075 = vmatprep.subr.bf16.mxu0 0
    %3076 = vmatpush2.bf16.msra.mxu0 %v2716
    %3077 = vmatprep.subr.bf16.mxu0 0
    %3078 = vmatpush2.bf16.msra.mxu0 %v2715
    %3079 = vmatprep.subr.bf16.mxu0 0
    %3080 = vmatpush2.bf16.msra.mxu0 %v2714
    %3081 = vmatprep.subr.bf16.mxu0 0
    %3082 = vmatpush2.bf16.msra.mxu0 %v2713
    %3083 = vmatprep.subr.bf16.mxu0 0
    %3084 = vmatpush2.bf16.msra.mxu0 %v2712
    %3085 = vmatprep.subr.bf16.mxu0 0
    %3086 = vmatpush2.bf16.msra.mxu0 %v2711
    %3087 = vmatprep.mubr.bf16.mxu0 %v1857
    %3088 = vmatmul.mubr.bf16.gmra.mxu0 %v1856
    %v3089 = vpop.f32.mrf.mxu0
    %v3090 = vadd.f32 %v3050, %v3089
    %v3091 = vpop.f32.mrf.mxu0
    %v3092 = vpop.f32.mrf.mxu0
    %v3093 = vpop.f32.mrf.mxu0
    %3094 = vdwg.mxu0
    %3095 = vmatprep.subr.bf16.mxu0 0
    %3096 = vmatpush1.bf16.msra.mxu0 %v2726
    %3097 = vmatprep.subr.bf16.mxu0 0
    %3098 = vmatpush1.bf16.msra.mxu0 %v2725
    %3099 = vmatprep.subr.bf16.mxu0 0
    %3100 = vmatpush1.bf16.msra.mxu0 %v2724
    %3101 = vmatprep.subr.bf16.mxu0 0
    %3102 = vmatpush1.bf16.msra.mxu0 %v2723
    %3103 = vmatprep.subr.bf16.mxu0 0
    %3104 = vmatpush1.bf16.msra.mxu0 %v2722
    %3105 = vmatprep.subr.bf16.mxu0 0
    %3106 = vmatpush1.bf16.msra.mxu0 %v2721
    %3107 = vmatprep.subr.bf16.mxu0 0
    %3108 = vmatpush1.bf16.msra.mxu0 %v2720
    %3109 = vmatprep.subr.bf16.mxu0 0
    %3110 = vmatpush1.bf16.msra.mxu0 %v2719
    %3111 = vmatprep.subr.bf16.mxu0 0
    %3112 = vmatpush2.bf16.msra.mxu0 %v2734
    %3113 = vmatprep.subr.bf16.mxu0 0
    %3114 = vmatpush2.bf16.msra.mxu0 %v2733
    %3115 = vmatprep.subr.bf16.mxu0 0
    %3116 = vmatpush2.bf16.msra.mxu0 %v2732
    %3117 = vmatprep.subr.bf16.mxu0 0
    %3118 = vmatpush2.bf16.msra.mxu0 %v2731
    %3119 = vmatprep.subr.bf16.mxu0 0
    %3120 = vmatpush2.bf16.msra.mxu0 %v2730
    %3121 = vmatprep.subr.bf16.mxu0 0
    %3122 = vmatpush2.bf16.msra.mxu0 %v2729
    %3123 = vmatprep.subr.bf16.mxu0 0
    %3124 = vmatpush2.bf16.msra.mxu0 %v2728
    %3125 = vmatprep.subr.bf16.mxu0 0
    %3126 = vmatpush2.bf16.msra.mxu0 %v2727
    %3127 = vmatprep.mubr.bf16.mxu0 %v1859
    %3128 = vmatmul.mubr.bf16.gmra.mxu0 %v1858
    %v3129 = vpop.f32.mrf.mxu0
    %v3130 = vadd.f32 %v3090, %v3129
    %v3131 = vpop.f32.mrf.mxu0
    %v3132 = vpop.f32.mrf.mxu0
    %v3133 = vpop.f32.mrf.mxu0
    %3134 = vdwg.mxu0
    %3135 = vmatprep.subr.bf16.mxu0 0
    %3136 = vmatpush1.bf16.msra.mxu0 %v2742
    %3137 = vmatprep.subr.bf16.mxu0 0
    %3138 = vmatpush1.bf16.msra.mxu0 %v2741
    %3139 = vmatprep.subr.bf16.mxu0 0
    %3140 = vmatpush1.bf16.msra.mxu0 %v2740
    %3141 = vmatprep.subr.bf16.mxu0 0
    %3142 = vmatpush1.bf16.msra.mxu0 %v2739
    %3143 = vmatprep.subr.bf16.mxu0 0
    %3144 = vmatpush1.bf16.msra.mxu0 %v2738
    %3145 = vmatprep.subr.bf16.mxu0 0
    %3146 = vmatpush1.bf16.msra.mxu0 %v2737
    %3147 = vmatprep.subr.bf16.mxu0 0
    %3148 = vmatpush1.bf16.msra.mxu0 %v2736
    %3149 = vmatprep.subr.bf16.mxu0 0
    %3150 = vmatpush1.bf16.msra.mxu0 %v2735
    %3151 = vmatprep.subr.bf16.mxu0 0
    %3152 = vmatpush2.bf16.msra.mxu0 %v2750
    %3153 = vmatprep.subr.bf16.mxu0 0
    %3154 = vmatpush2.bf16.msra.mxu0 %v2749
    %3155 = vmatprep.subr.bf16.mxu0 0
    %3156 = vmatpush2.bf16.msra.mxu0 %v2748
    %3157 = vmatprep.subr.bf16.mxu0 0
    %3158 = vmatpush2.bf16.msra.mxu0 %v2747
    %3159 = vmatprep.subr.bf16.mxu0 0
    %3160 = vmatpush2.bf16.msra.mxu0 %v2746
    %3161 = vmatprep.subr.bf16.mxu0 0
    %3162 = vmatpush2.bf16.msra.mxu0 %v2745
    %3163 = vmatprep.subr.bf16.mxu0 0
    %3164 = vmatpush2.bf16.msra.mxu0 %v2744
    %3165 = vmatprep.subr.bf16.mxu0 0
    %3166 = vmatpush2.bf16.msra.mxu0 %v2743
    %3167 = vmatprep.mubr.bf16.mxu0 %v1861
    %3168 = vmatmul.mubr.bf16.gmra.mxu0 %v1860
    %v3169 = vpop.f32.mrf.mxu0
    %v3170 = vadd.f32 %v3130, %v3169
    %v3171 = vpop.f32.mrf.mxu0
    %v3172 = vpop.f32.mrf.mxu0
    %v3173 = vpop.f32.mrf.mxu0
    %3174 = vdwg.mxu0
    %3175 = vmatprep.subr.bf16.mxu0 0
    %3176 = vmatpush1.bf16.msra.mxu0 %v2758
    %3177 = vmatprep.subr.bf16.mxu0 0
    %3178 = vmatpush1.bf16.msra.mxu0 %v2757
    %3179 = vmatprep.subr.bf16.mxu0 0
    %3180 = vmatpush1.bf16.msra.mxu0 %v2756
    %3181 = vmatprep.subr.bf16.mxu0 0
    %3182 = vmatpush1.bf16.msra.mxu0 %v2755
    %3183 = vmatprep.subr.bf16.mxu0 0
    %3184 = vmatpush1.bf16.msra.mxu0 %v2754
    %3185 = vmatprep.subr.bf16.mxu0 0
    %3186 = vmatpush1.bf16.msra.mxu0 %v2753
    %3187 = vmatprep.subr.bf16.mxu0 0
    %3188 = vmatpush1.bf16.msra.mxu0 %v2752
    %3189 = vmatprep.subr.bf16.mxu0 0
    %3190 = vmatpush1.bf16.msra.mxu0 %v2751
    %3191 = vmatprep.subr.bf16.mxu0 0
    %3192 = vmatpush2.bf16.msra.mxu0 %v2766
    %3193 = vmatprep.subr.bf16.mxu0 0
    %3194 = vmatpush2.bf16.msra.mxu0 %v2765
    %3195 = vmatprep.subr.bf16.mxu0 0
    %3196 = vmatpush2.bf16.msra.mxu0 %v2764
    %3197 = vmatprep.subr.bf16.mxu0 0
    %3198 = vmatpush2.bf16.msra.mxu0 %v2763
    %3199 = vmatprep.subr.bf16.mxu0 0
    %3200 = vmatpush2.bf16.msra.mxu0 %v2762
    %3201 = vmatprep.subr.bf16.mxu0 0
    %3202 = vmatpush2.bf16.msra.mxu0 %v2761
    %3203 = vmatprep.subr.bf16.mxu0 0
    %3204 = vmatpush2.bf16.msra.mxu0 %v2760
    %3205 = vmatprep.subr.bf16.mxu0 0
    %3206 = vmatpush2.bf16.msra.mxu0 %v2759
    %3207 = vmatprep.mubr.bf16.mxu0 %v1863
    %3208 = vmatmul.mubr.bf16.gmra.mxu0 %v1862
    %v3209 = vpop.f32.mrf.mxu0
    %v3210 = vadd.f32 %v3170, %v3209
    %v3211 = vpop.f32.mrf.mxu0
    %v3212 = vpop.f32.mrf.mxu0
    %v3213 = vpop.f32.mrf.mxu0
    %3214 = vdwg.mxu0
    %3215 = vst [vmem:[#allocation6] sm:$0x3] %v3210
    // Predicated region
    $region68: #{nnclr_forward.1} parent=1 // pred_check
      _
    $region69: #{nnclr_forward.1} parent=1 // pred_check_branch
      %3217 = sbr.rel (0) target = $region71
    $region70: #{nnclr_forward.1} parent=1 // pred_region
      %s3219 = ssub.s32 32, 32
      %3220 = vsyncadd [#allocation3], %s3219
      %s3222 = sshll.u32 [#allocation2], 4
      %s3223 = int_to_ptr.vmem [resolvable:$true] %s3222
      %3225 = dma.vmem_to_hbm [thread:$0]  %s3223, 32, %s13, [#allocation3]
    $region71: #{nnclr_forward.1} parent=1 // pred_fallthru
      _
    // Predicated region
    $region72: #{nnclr_forward.1} parent=1 // pred_check
      _
    $region73: #{nnclr_forward.1} parent=1 // pred_check_branch
      %3227 = sbr.rel (0) target = $region75
    $region74: #{nnclr_forward.1} parent=1 // pred_region
      %s3229 = ssub.s32 32, 32
      %3230 = vsyncadd [#allocation5], %s3229
      %s3232 = sshll.u32 [#allocation4], 4
      %s3233 = int_to_ptr.vmem [resolvable:$true] %s3232
      %3235 = dma.vmem_to_hbm [thread:$0]  %s3233, 32, %s14, [#allocation5]
    $region75: #{nnclr_forward.1} parent=1 // pred_fallthru
      _
    // Predicated region
    $region76: #{nnclr_forward.1} parent=1 // pred_check
      _
    $region77: #{nnclr_forward.1} parent=1 // pred_check_branch
      %3237 = sbr.rel (0) target = $region79
    $region78: #{nnclr_forward.1} parent=1 // pred_region
      %s3239 = ssub.s32 32, 32
      %3240 = vsyncadd [#allocation5], %s3239
      %s3242 = sshll.u32 [#allocation6], 4
      %s3243 = int_to_ptr.vmem [resolvable:$true] %s3242
      %3245 = dma.vmem_to_hbm [thread:$0]  %s3243, 32, %s15, [#allocation5]
    $region79: #{nnclr_forward.1} parent=1 // pred_fallthru
      _
    // Predicated region
    $region80: #{nnclr_forward.1} parent=1 // pred_check
      _
    $region81: #{nnclr_forward.1} parent=1 // pred_check_branch
      %3247 = sbr.rel (0) target = $region83
    $region82: #{nnclr_forward.1} parent=1 // pred_region
      %3248 = dma.done [#allocation3], 32
    $region83: #{nnclr_forward.1} parent=1 // pred_fallthru
      _
    // Predicated region
    $region84: #{nnclr_forward.1} parent=1 // pred_check
      _
    $region85: #{nnclr_forward.1} parent=1 // pred_check_branch
      %3250 = sbr.rel (0) target = $region87
    $region86: #{nnclr_forward.1} parent=1 // pred_region
      %3251 = dma.done [#allocation5], 32
    $region87: #{nnclr_forward.1} parent=1 // pred_fallthru
      _
    // Predicated region
    $region88: #{nnclr_forward.1} parent=1 // pred_check
      _
    $region89: #{nnclr_forward.1} parent=1 // pred_check_branch
      %3253 = sbr.rel (0) target = $region91
    $region90: #{nnclr_forward.1} parent=1 // pred_region
      %3254 = dma.done [#allocation5], 32
    $region91: #{nnclr_forward.1} parent=1 // pred_fallthru
      _
    %3255 = vsyncpa [#allocation3], 1
    %3256 = vsyncpa [#allocation5], 1

</llo_original>
